<compile_context>
chip_gen: v7x
topology: tpu7x:2x2x1
jax: 0.10.0
libtpu: 0.0.40
codegen_flags: <defaults>
</compile_context>

<pallas_src>
import functools

import jax
import jax.numpy as jnp
import numpy as np
from jax.experimental import pallas as pl
from jax.experimental.pallas import tpu as pltpu

LANE = 128                     # TPU lane width
MATMUL_DTYPE = jnp.bfloat16    # MXU input dtype (accumulation is f32)


# ---------------------------------------------------------------------------
# Fused LeNet kernel (one batch tile per grid step)
# ---------------------------------------------------------------------------
def _lenet_kernel(x_ref, w1_ref, b1_ref, w2_ref, b2_ref, w3_ref, b3_ref,
                  w4_ref, b4_ref, w5_ref, b5_ref, o_ref, *, num_classes):
    tb = x_ref.shape[0]
    cdt = MATMUL_DTYPE

    # ---- conv1 (5x5, pad 2) + relu + 2x2 maxpool -----------------------------
    # For each kernel row ki: (tb*28, 32) x (32, 256) matmul whose columns are
    # laid out as (pool_parity, pooled_w<14, cout<6); accumulate over ki.
    x = x_ref[...]                                            # (tb, 32, 32) bf16
    y1 = None
    for ki in range(5):
        xs = x[:, ki:ki + 28, :].reshape(tb * 28, 32)
        d = jnp.dot(xs, w1_ref[ki], preferred_element_type=jnp.float32)
        y1 = d if y1 is None else y1 + d                      # (tb*28, 256) f32
    y1 = jnp.maximum(y1 + b1_ref[...], 0.0)                   # bias + relu
    y1 = jnp.maximum(y1[:, :LANE], y1[:, LANE:])              # pool over width
    r = y1.reshape(tb, 14, 2, LANE)
    x1 = jnp.maximum(r[:, :, 0, :], r[:, :, 1, :]).astype(cdt)   # (tb, 14, 128)

    # ---- conv2 (5x5, valid) + relu + 2x2 maxpool ------------------------------
    # Rows of w2 are (w_in*6 + cin); columns are (pool_parity, pooled_w<5, cout<16).
    y2 = None
    for ki in range(5):
        xs = x1[:, ki:ki + 10, :].reshape(tb * 10, LANE)
        d = jnp.dot(xs, w2_ref[ki], preferred_element_type=jnp.float32)
        y2 = d if y2 is None else y2 + d                      # (tb*10, 256) f32
    y2 = jnp.maximum(y2 + b2_ref[...], 0.0)
    y2 = jnp.maximum(y2[:, :LANE], y2[:, LANE:])
    r = y2.reshape(tb, 5, 2, LANE)
    x2 = jnp.maximum(r[:, :, 0, :], r[:, :, 1, :]).astype(cdt)   # (tb, 5, 128)

    # ---- conv3 (5x5 over 5x5 -> 1x1 spatial) + relu ---------------------------
    h = None
    for hi in range(5):
        d = jnp.dot(x2[:, hi, :], w3_ref[hi], preferred_element_type=jnp.float32)
        h = d if h is None else h + d                         # (tb, 128) f32
    h = jnp.maximum(h + b3_ref[...], 0.0).astype(cdt)

    # ---- fc4 + relu -----------------------------------------------------------
    h = jnp.dot(h, w4_ref[...], preferred_element_type=jnp.float32) + b4_ref[...]
    h = jnp.maximum(h, 0.0).astype(cdt)

    # ---- fc5 + log_softmax (all f32) ------------------------------------------
    z = jnp.dot(h, w5_ref[...], preferred_element_type=jnp.float32) + b5_ref[...]
    lane = jax.lax.broadcasted_iota(jnp.int32, z.shape, 1)
    z = jnp.where(lane < num_classes, z, -1e30)   # mask padded class lanes (f32 only)
    m = jnp.max(z, axis=-1, keepdims=True)
    s = z - m
    lse = jnp.log(jnp.sum(jnp.exp(s), axis=-1, keepdims=True))
    o_ref[...] = (s - lse).astype(o_ref.dtype)


# ---------------------------------------------------------------------------
# pallas_call wrapper
# ---------------------------------------------------------------------------
def _batch_tile(n, max_tile=32):
    """Batch tile so the 1-D grid has >=2 'parallel' steps (v7x dual-TC) while
    keeping the per-step VMEM live set to a few MB."""
    if n <= 1:
        return 1
    return min(max_tile, (n + 1) // 2)


def lenet_pallas(x_pad, packed, num_classes, batch_tile):
    """x_pad: (n_pad, 32, 32) bf16 (spatially pre-padded, batch multiple of tile)."""
    n_pad = x_pad.shape[0]
    n_tiles = n_pad // batch_tile
    kernel = functools.partial(_lenet_kernel, num_classes=num_classes)

    def _resident(a):   # full array, constant index_map -> stays resident in VMEM
        return pl.BlockSpec(a.shape, lambda i, n=a.ndim: (0,) * n)

    out = pl.pallas_call(
        kernel,
        out_shape=jax.ShapeDtypeStruct((n_tiles, batch_tile, LANE), jnp.float32),
        grid=(n_tiles,),
        in_specs=[
            pl.BlockSpec((batch_tile, 32, 32), lambda i: (i, 0, 0)),
            _resident(packed["w1"]), _resident(packed["b1"]),
            _resident(packed["w2"]), _resident(packed["b2"]),
            _resident(packed["w3"]), _resident(packed["b3"]),
            _resident(packed["w4"]), _resident(packed["b4"]),
            _resident(packed["w5"]), _resident(packed["b5"]),
        ],
        out_specs=pl.BlockSpec((None, batch_tile, LANE), lambda i: (i, 0, 0)),
        compiler_params=pltpu.CompilerParams(
            dimension_semantics=("parallel",)),
    )(x_pad, packed["w1"], packed["b1"], packed["w2"], packed["b2"],
      packed["w3"], packed["b3"], packed["w4"], packed["b4"],
      packed["w5"], packed["b5"])
    return out.reshape(n_pad, LANE)


@functools.partial(jax.jit, static_argnames=("num_classes",))
def lenet_forward(packed, x_nchw, num_classes=10):
    n = x_nchw.shape[0]
    # NCHW, in_channels=1 -> (N, 28, 28); zero-pad spatially by 2 (conv1 pad=2)
    # so the in-kernel conv1 is a valid conv on a 32x32 image.
    img = x_nchw[:, 0, :, :].astype(jnp.float32)
    img = jnp.pad(img, ((0, 0), (2, 2), (2, 2)))
    tb = _batch_tile(n)
    n_pad = ((n + tb - 1) // tb) * tb
    if n_pad != n:
        img = jnp.pad(img, ((0, n_pad - n), (0, 0), (0, 0)))
    img = img.astype(MATMUL_DTYPE)
    out = lenet_pallas(img, packed, num_classes, tb)
    return out[:n, :num_classes]


# ---------------------------------------------------------------------------
# Parameter init (PyTorch-like) and host-side structured packing
# ---------------------------------------------------------------------------
def init_params(key, num_classes=10):
    """Conv weights in (kh, kw, cin, cout) layout; fc weights in (in, out)."""
    def uinit(k, shape, fan_in):
        bound = 1.0 / np.sqrt(fan_in)
        return jax.random.uniform(k, shape, jnp.float32, -bound, bound)

    ks = jax.random.split(key, 10)
    return {
        "conv1_w": uinit(ks[0], (5, 5, 1, 6), 25),
        "conv1_b": uinit(ks[1], (6,), 25),
        "conv2_w": uinit(ks[2], (5, 5, 6, 16), 150),
        "conv2_b": uinit(ks[3], (16,), 150),
        "conv3_w": uinit(ks[4], (5, 5, 16, 120), 400),
        "conv3_b": uinit(ks[5], (120,), 400),
        "fc4_w": uinit(ks[6], (120, 84), 120),
        "fc4_b": uinit(ks[7], (84,), 120),
        "fc5_w": uinit(ks[8], (84, num_classes), 84),
        "fc5_b": uinit(ks[9], (num_classes,), 84),
    }


def pack_params(params, num_classes=10):
    """Fold the im2col structure and width-pooling lane order into the conv
    weight matrices (host-side, done once). Matmul columns for conv1/conv2 are
    laid out as lane = parity*128 + pooled_w*Cout + cout."""
    assert num_classes <= LANE
    p = {k: np.asarray(v, np.float32) for k, v in params.items()}

    # conv1: (5, 32, 256); rows = padded input column, cols = (parity, wp<14, c<6)
    w1 = np.zeros((5, 32, 2 * LANE), np.float32)
    b1 = np.zeros((1, 2 * LANE), np.float32)
    for par in range(2):
        for wp in range(14):
            col = par * LANE + wp * 6
            b1[0, col:col + 6] = p["conv1_b"]
            for ki in range(5):
                for kj in range(5):
                    w_in = 2 * wp + par + kj
                    w1[ki, w_in, col:col + 6] = p["conv1_w"][ki, kj, 0, :]

    # conv2: (5, 128, 256); rows = w_in*6+cin (w_in<14), cols = (parity, wp<5, c<16)
    w2 = np.zeros((5, LANE, 2 * LANE), np.float32)
    b2 = np.zeros((1, 2 * LANE), np.float32)
    for par in range(2):
        for wp in range(5):
            col = par * LANE + wp * 16
            b2[0, col:col + 16] = p["conv2_b"]
            for ki in range(5):
                for kj in range(5):
                    w_in = 2 * wp + par + kj
                    w2[ki, w_in * 6:w_in * 6 + 6, col:col + 16] = p["conv2_w"][ki, kj]

    # conv3: (5, 128, 128); one matrix per kernel row, rows = w*16+cin (w<5)
    w3 = np.zeros((5, LANE, LANE), np.float32)
    b3 = np.zeros((1, LANE), np.float32)
    b3[0, :120] = p["conv3_b"]
    for kh in range(5):
        for kw in range(5):
            w3[kh, kw * 16:kw * 16 + 16, :120] = p["conv3_w"][kh, kw]

    # fc4 / fc5 zero-padded to (128, 128)
    w4 = np.zeros((LANE, LANE), np.float32); w4[:120, :84] = p["fc4_w"]
    b4 = np.zeros((1, LANE), np.float32);    b4[0, :84] = p["fc4_b"]
    w5 = np.zeros((LANE, LANE), np.float32); w5[:84, :num_classes] = p["fc5_w"]
    b5 = np.zeros((1, LANE), np.float32);    b5[0, :num_classes] = p["fc5_b"]

    wcast = lambda a: jnp.asarray(a, MATMUL_DTYPE)
    f32 = lambda a: jnp.asarray(a, jnp.float32)
    return {"w1": wcast(w1), "b1": f32(b1), "w2": wcast(w2), "b2": f32(b2),
            "w3": wcast(w3), "b3": f32(b3), "w4": wcast(w4), "b4": f32(b4),
            "w5": wcast(w5), "b5": f32(b5)}


# ---------------------------------------------------------------------------
# Pure-JAX (XLA) reference, matching the PyTorch module
# ---------------------------------------------------------------------------
def lenet_reference(params, x_nchw):
    x = x_nchw.astype(jnp.float32)

    def conv(x, w, b, pad):
        y = jax.lax.conv_general_dilated(
            x, w, window_strides=(1, 1), padding=[(pad, pad), (pad, pad)],
            dimension_numbers=("NCHW", "HWIO", "NCHW"))
        return y + b[None, :, None, None]

    def pool(x):
        return jax.lax.reduce_window(x, -jnp.inf, jax.lax.max,
                                     (1, 1, 2, 2), (1, 1, 2, 2), "VALID")

    y = pool(jnp.maximum(conv(x, params["conv1_w"], params["conv1_b"], 2), 0.0))
    y = pool(jnp.maximum(conv(y, params["conv2_w"], params["conv2_b"], 0), 0.0))
    y = jnp.maximum(conv(y, params["conv3_w"], params["conv3_b"], 0), 0.0)
    y = y.reshape(y.shape[0], -1)                       # (N, 120)
    y = jnp.maximum(y @ params["fc4_w"] + params["fc4_b"], 0.0)
    z = y @ params["fc5_w"] + params["fc5_b"]
    return jax.nn.log_softmax(z, axis=1)


# ---------------------------------------------------------------------------
if __name__ == "__main__":
    key = jax.random.PRNGKey(0)
    pkey, xkey = jax.random.split(key)
    num_classes = 10

    params = init_params(pkey, num_classes=num_classes)
    packed = pack_params(params, num_classes=num_classes)
    x = jax.random.normal(xkey, (2, 1, 28, 28), dtype=jnp.float32)   # NCHW MNIST-like

    out = jax.block_until_ready(lenet_forward(packed, x, num_classes=num_classes))

    assert out.shape == (2, num_classes), out.shape
    # log_softmax rows must sum (in prob space) to ~1
    assert bool(jnp.all(jnp.abs(jnp.sum(jnp.exp(out), axis=1) - 1.0) < 1e-4))
    # match the pure-JAX reference (bf16 MXU inputs -> loose tolerance)
    ref = lenet_reference(params, x)
    assert bool(jnp.max(jnp.abs(out - ref)) < 0.1), float(jnp.max(jnp.abs(out - ref)))
    print("KERNEL_OK")
</pallas_src>

<mosaic_0001>
module attributes {stable_mosaic.version = 11 : i64} {
  func.func @_lenet_kernel(%arg0: i32, %arg1: memref<1x32x32xbf16, #tpu.memory_space<vmem>>, %arg2: memref<5x32x256xbf16, #tpu.memory_space<vmem>>, %arg3: memref<1x256xf32, #tpu.memory_space<vmem>>, %arg4: memref<5x128x256xbf16, #tpu.memory_space<vmem>>, %arg5: memref<1x256xf32, #tpu.memory_space<vmem>>, %arg6: memref<5x128x128xbf16, #tpu.memory_space<vmem>>, %arg7: memref<1x128xf32, #tpu.memory_space<vmem>>, %arg8: memref<128x128xbf16, #tpu.memory_space<vmem>>, %arg9: memref<1x128xf32, #tpu.memory_space<vmem>>, %arg10: memref<128x128xbf16, #tpu.memory_space<vmem>>, %arg11: memref<1x128xf32, #tpu.memory_space<vmem>>, %arg12: memref<1x1x128xf32, #tpu.memory_space<vmem>>) attributes {dimension_semantics = [#tpu.dimension_semantics<parallel>], iteration_bounds = array<i64: 2>, scalar_prefetch = 0 : i64, scratch_operands = 0 : i64, tpu.core_type = #tpu.core_type<tc>, window_params = [{transform_indices = @transform_0, window_bounds = array<i64: 1, 32, 32>}, {pipeline_mode = #tpu.pipeline_mode<synchronous>, transform_indices = @transform_1, window_bounds = array<i64: 5, 32, 256>}, {pipeline_mode = #tpu.pipeline_mode<synchronous>, transform_indices = @transform_2, window_bounds = array<i64: 1, 256>}, {pipeline_mode = #tpu.pipeline_mode<synchronous>, transform_indices = @transform_3, window_bounds = array<i64: 5, 128, 256>}, {pipeline_mode = #tpu.pipeline_mode<synchronous>, transform_indices = @transform_4, window_bounds = array<i64: 1, 256>}, {pipeline_mode = #tpu.pipeline_mode<synchronous>, transform_indices = @transform_5, window_bounds = array<i64: 5, 128, 128>}, {pipeline_mode = #tpu.pipeline_mode<synchronous>, transform_indices = @transform_6, window_bounds = array<i64: 1, 128>}, {pipeline_mode = #tpu.pipeline_mode<synchronous>, transform_indices = @transform_7, window_bounds = array<i64: 128, 128>}, {pipeline_mode = #tpu.pipeline_mode<synchronous>, transform_indices = @transform_8, window_bounds = array<i64: 1, 128>}, {pipeline_mode = #tpu.pipeline_mode<synchronous>, transform_indices = @transform_9, window_bounds = array<i64: 128, 128>}, {pipeline_mode = #tpu.pipeline_mode<synchronous>, transform_indices = @transform_10, window_bounds = array<i64: 1, 128>}, {transform_indices = @transform_11, window_bounds = array<i64: 1, 1, 128>}]} {
    %c0 = arith.constant 0 : index
    %c0_0 = arith.constant 0 : index
    %c0_1 = arith.constant 0 : index
    %0 = vector.load %arg1[%c0, %c0_0, %c0_1] : memref<1x32x32xbf16, #tpu.memory_space<vmem>>, vector<1x32x32xbf16>
    %1 = vector.extract_strided_slice %0 {offsets = [0, 0, 0], sizes = [1, 28, 32], strides = [1, 1, 1]} : vector<1x32x32xbf16> to vector<1x28x32xbf16>
    %2 = vector.shape_cast %1 : vector<1x28x32xbf16> to vector<28x32xbf16>
    %c0_2 = arith.constant 0 : index
    %c0_3 = arith.constant 0 : index
    %c0_4 = arith.constant 0 : index
    %3 = vector.load %arg2[%c0_2, %c0_3, %c0_4] : memref<5x32x256xbf16, #tpu.memory_space<vmem>>, vector<1x32x256xbf16>
    %4 = vector.shape_cast %3 : vector<1x32x256xbf16> to vector<32x256xbf16>
    %cst = arith.constant dense<0.000000e+00> : vector<28x256xf32>
    %5 = tpu.matmul %2, %4, %cst {dimension_numbers = #tpu.dot_dimension_numbers<[1], [0], [0], [1], [0, 0, 1, 1], [], []>} : vector<28x32xbf16>, vector<32x256xbf16>, vector<28x256xf32> -> vector<28x256xf32>
    %6 = vector.extract_strided_slice %0 {offsets = [0, 1, 0], sizes = [1, 28, 32], strides = [1, 1, 1]} : vector<1x32x32xbf16> to vector<1x28x32xbf16>
    %7 = vector.shape_cast %6 : vector<1x28x32xbf16> to vector<28x32xbf16>
    %c1 = arith.constant 1 : index
    %c0_5 = arith.constant 0 : index
    %c0_6 = arith.constant 0 : index
    %8 = vector.load %arg2[%c1, %c0_5, %c0_6] : memref<5x32x256xbf16, #tpu.memory_space<vmem>>, vector<1x32x256xbf16>
    %9 = vector.shape_cast %8 : vector<1x32x256xbf16> to vector<32x256xbf16>
    %cst_7 = arith.constant dense<0.000000e+00> : vector<28x256xf32>
    %10 = tpu.matmul %7, %9, %cst_7 {dimension_numbers = #tpu.dot_dimension_numbers<[1], [0], [0], [1], [0, 0, 1, 1], [], []>} : vector<28x32xbf16>, vector<32x256xbf16>, vector<28x256xf32> -> vector<28x256xf32>
    %11 = arith.addf %5, %10 : vector<28x256xf32>
    %12 = vector.extract_strided_slice %0 {offsets = [0, 2, 0], sizes = [1, 28, 32], strides = [1, 1, 1]} : vector<1x32x32xbf16> to vector<1x28x32xbf16>
    %13 = vector.shape_cast %12 : vector<1x28x32xbf16> to vector<28x32xbf16>
    %c2 = arith.constant 2 : index
    %c0_8 = arith.constant 0 : index
    %c0_9 = arith.constant 0 : index
    %14 = vector.load %arg2[%c2, %c0_8, %c0_9] : memref<5x32x256xbf16, #tpu.memory_space<vmem>>, vector<1x32x256xbf16>
    %15 = vector.shape_cast %14 : vector<1x32x256xbf16> to vector<32x256xbf16>
    %cst_10 = arith.constant dense<0.000000e+00> : vector<28x256xf32>
    %16 = tpu.matmul %13, %15, %cst_10 {dimension_numbers = #tpu.dot_dimension_numbers<[1], [0], [0], [1], [0, 0, 1, 1], [], []>} : vector<28x32xbf16>, vector<32x256xbf16>, vector<28x256xf32> -> vector<28x256xf32>
    %17 = arith.addf %11, %16 : vector<28x256xf32>
    %18 = vector.extract_strided_slice %0 {offsets = [0, 3, 0], sizes = [1, 28, 32], strides = [1, 1, 1]} : vector<1x32x32xbf16> to vector<1x28x32xbf16>
    %19 = vector.shape_cast %18 : vector<1x28x32xbf16> to vector<28x32xbf16>
    %c3 = arith.constant 3 : index
    %c0_11 = arith.constant 0 : index
    %c0_12 = arith.constant 0 : index
    %20 = vector.load %arg2[%c3, %c0_11, %c0_12] : memref<5x32x256xbf16, #tpu.memory_space<vmem>>, vector<1x32x256xbf16>
    %21 = vector.shape_cast %20 : vector<1x32x256xbf16> to vector<32x256xbf16>
    %cst_13 = arith.constant dense<0.000000e+00> : vector<28x256xf32>
    %22 = tpu.matmul %19, %21, %cst_13 {dimension_numbers = #tpu.dot_dimension_numbers<[1], [0], [0], [1], [0, 0, 1, 1], [], []>} : vector<28x32xbf16>, vector<32x256xbf16>, vector<28x256xf32> -> vector<28x256xf32>
    %23 = arith.addf %17, %22 : vector<28x256xf32>
    %24 = vector.extract_strided_slice %0 {offsets = [0, 4, 0], sizes = [1, 28, 32], strides = [1, 1, 1]} : vector<1x32x32xbf16> to vector<1x28x32xbf16>
    %25 = vector.shape_cast %24 : vector<1x28x32xbf16> to vector<28x32xbf16>
    %c4 = arith.constant 4 : index
    %c0_14 = arith.constant 0 : index
    %c0_15 = arith.constant 0 : index
    %26 = vector.load %arg2[%c4, %c0_14, %c0_15] : memref<5x32x256xbf16, #tpu.memory_space<vmem>>, vector<1x32x256xbf16>
    %27 = vector.shape_cast %26 : vector<1x32x256xbf16> to vector<32x256xbf16>
    %cst_16 = arith.constant dense<0.000000e+00> : vector<28x256xf32>
    %28 = tpu.matmul %25, %27, %cst_16 {dimension_numbers = #tpu.dot_dimension_numbers<[1], [0], [0], [1], [0, 0, 1, 1], [], []>} : vector<28x32xbf16>, vector<32x256xbf16>, vector<28x256xf32> -> vector<28x256xf32>
    %29 = arith.addf %23, %28 : vector<28x256xf32>
    %c0_17 = arith.constant 0 : index
    %c0_18 = arith.constant 0 : index
    %30 = vector.load %arg3[%c0_17, %c0_18] : memref<1x256xf32, #tpu.memory_space<vmem>>, vector<1x256xf32>
    %31 = vector.broadcast %30 : vector<1x256xf32> to vector<28x256xf32>
    %32 = arith.addf %29, %31 : vector<28x256xf32>
    %cst_19 = arith.constant 0.000000e+00 : f32
    %33 = vector.broadcast %cst_19 : f32 to vector<28x256xf32>
    %34 = arith.maximumf %32, %33 : vector<28x256xf32>
    %35 = vector.extract_strided_slice %34 {offsets = [0, 0], sizes = [28, 128], strides = [1, 1]} : vector<28x256xf32> to vector<28x128xf32>
    %36 = vector.extract_strided_slice %34 {offsets = [0, 128], sizes = [28, 128], strides = [1, 1]} : vector<28x256xf32> to vector<28x128xf32>
    %37 = arith.maximumf %35, %36 : vector<28x128xf32>
    %38 = vector.shape_cast %37 : vector<28x128xf32> to vector<1x14x2x128xf32>
    %39 = vector.extract_strided_slice %38 {offsets = [0, 0, 0, 0], sizes = [1, 14, 1, 128], strides = [1, 1, 1, 1]} : vector<1x14x2x128xf32> to vector<1x14x1x128xf32>
    %40 = vector.shape_cast %39 : vector<1x14x1x128xf32> to vector<1x14x128xf32>
    %41 = vector.extract_strided_slice %38 {offsets = [0, 0, 1, 0], sizes = [1, 14, 1, 128], strides = [1, 1, 1, 1]} : vector<1x14x2x128xf32> to vector<1x14x1x128xf32>
    %42 = vector.shape_cast %41 : vector<1x14x1x128xf32> to vector<1x14x128xf32>
    %43 = arith.maximumf %40, %42 : vector<1x14x128xf32>
    %44 = arith.truncf %43 : vector<1x14x128xf32> to vector<1x14x128xbf16>
    %45 = vector.extract_strided_slice %44 {offsets = [0, 0, 0], sizes = [1, 10, 128], strides = [1, 1, 1]} : vector<1x14x128xbf16> to vector<1x10x128xbf16>
    %46 = vector.shape_cast %45 : vector<1x10x128xbf16> to vector<10x128xbf16>
    %c0_20 = arith.constant 0 : index
    %c0_21 = arith.constant 0 : index
    %c0_22 = arith.constant 0 : index
    %47 = vector.load %arg4[%c0_20, %c0_21, %c0_22] : memref<5x128x256xbf16, #tpu.memory_space<vmem>>, vector<1x128x256xbf16>
    %48 = vector.shape_cast %47 : vector<1x128x256xbf16> to vector<128x256xbf16>
    %cst_23 = arith.constant dense<0.000000e+00> : vector<10x256xf32>
    %49 = tpu.matmul %46, %48, %cst_23 {dimension_numbers = #tpu.dot_dimension_numbers<[1], [0], [0], [1], [0, 0, 1, 1], [], []>} : vector<10x128xbf16>, vector<128x256xbf16>, vector<10x256xf32> -> vector<10x256xf32>
    %50 = vector.extract_strided_slice %44 {offsets = [0, 1, 0], sizes = [1, 10, 128], strides = [1, 1, 1]} : vector<1x14x128xbf16> to vector<1x10x128xbf16>
    %51 = vector.shape_cast %50 : vector<1x10x128xbf16> to vector<10x128xbf16>
    %c1_24 = arith.constant 1 : index
    %c0_25 = arith.constant 0 : index
    %c0_26 = arith.constant 0 : index
    %52 = vector.load %arg4[%c1_24, %c0_25, %c0_26] : memref<5x128x256xbf16, #tpu.memory_space<vmem>>, vector<1x128x256xbf16>
    %53 = vector.shape_cast %52 : vector<1x128x256xbf16> to vector<128x256xbf16>
    %cst_27 = arith.constant dense<0.000000e+00> : vector<10x256xf32>
    %54 = tpu.matmul %51, %53, %cst_27 {dimension_numbers = #tpu.dot_dimension_numbers<[1], [0], [0], [1], [0, 0, 1, 1], [], []>} : vector<10x128xbf16>, vector<128x256xbf16>, vector<10x256xf32> -> vector<10x256xf32>
    %55 = arith.addf %49, %54 : vector<10x256xf32>
    %56 = vector.extract_strided_slice %44 {offsets = [0, 2, 0], sizes = [1, 10, 128], strides = [1, 1, 1]} : vector<1x14x128xbf16> to vector<1x10x128xbf16>
    %57 = vector.shape_cast %56 : vector<1x10x128xbf16> to vector<10x128xbf16>
    %c2_28 = arith.constant 2 : index
    %c0_29 = arith.constant 0 : index
    %c0_30 = arith.constant 0 : index
    %58 = vector.load %arg4[%c2_28, %c0_29, %c0_30] : memref<5x128x256xbf16, #tpu.memory_space<vmem>>, vector<1x128x256xbf16>
    %59 = vector.shape_cast %58 : vector<1x128x256xbf16> to vector<128x256xbf16>
    %cst_31 = arith.constant dense<0.000000e+00> : vector<10x256xf32>
    %60 = tpu.matmul %57, %59, %cst_31 {dimension_numbers = #tpu.dot_dimension_numbers<[1], [0], [0], [1], [0, 0, 1, 1], [], []>} : vector<10x128xbf16>, vector<128x256xbf16>, vector<10x256xf32> -> vector<10x256xf32>
    %61 = arith.addf %55, %60 : vector<10x256xf32>
    %62 = vector.extract_strided_slice %44 {offsets = [0, 3, 0], sizes = [1, 10, 128], strides = [1, 1, 1]} : vector<1x14x128xbf16> to vector<1x10x128xbf16>
    %63 = vector.shape_cast %62 : vector<1x10x128xbf16> to vector<10x128xbf16>
    %c3_32 = arith.constant 3 : index
    %c0_33 = arith.constant 0 : index
    %c0_34 = arith.constant 0 : index
    %64 = vector.load %arg4[%c3_32, %c0_33, %c0_34] : memref<5x128x256xbf16, #tpu.memory_space<vmem>>, vector<1x128x256xbf16>
    %65 = vector.shape_cast %64 : vector<1x128x256xbf16> to vector<128x256xbf16>
    %cst_35 = arith.constant dense<0.000000e+00> : vector<10x256xf32>
    %66 = tpu.matmul %63, %65, %cst_35 {dimension_numbers = #tpu.dot_dimension_numbers<[1], [0], [0], [1], [0, 0, 1, 1], [], []>} : vector<10x128xbf16>, vector<128x256xbf16>, vector<10x256xf32> -> vector<10x256xf32>
    %67 = arith.addf %61, %66 : vector<10x256xf32>
    %68 = vector.extract_strided_slice %44 {offsets = [0, 4, 0], sizes = [1, 10, 128], strides = [1, 1, 1]} : vector<1x14x128xbf16> to vector<1x10x128xbf16>
    %69 = vector.shape_cast %68 : vector<1x10x128xbf16> to vector<10x128xbf16>
    %c4_36 = arith.constant 4 : index
    %c0_37 = arith.constant 0 : index
    %c0_38 = arith.constant 0 : index
    %70 = vector.load %arg4[%c4_36, %c0_37, %c0_38] : memref<5x128x256xbf16, #tpu.memory_space<vmem>>, vector<1x128x256xbf16>
    %71 = vector.shape_cast %70 : vector<1x128x256xbf16> to vector<128x256xbf16>
    %cst_39 = arith.constant dense<0.000000e+00> : vector<10x256xf32>
    %72 = tpu.matmul %69, %71, %cst_39 {dimension_numbers = #tpu.dot_dimension_numbers<[1], [0], [0], [1], [0, 0, 1, 1], [], []>} : vector<10x128xbf16>, vector<128x256xbf16>, vector<10x256xf32> -> vector<10x256xf32>
    %73 = arith.addf %67, %72 : vector<10x256xf32>
    %c0_40 = arith.constant 0 : index
    %c0_41 = arith.constant 0 : index
    %74 = vector.load %arg5[%c0_40, %c0_41] : memref<1x256xf32, #tpu.memory_space<vmem>>, vector<1x256xf32>
    %75 = vector.broadcast %74 : vector<1x256xf32> to vector<10x256xf32>
    %76 = arith.addf %73, %75 : vector<10x256xf32>
    %cst_42 = arith.constant 0.000000e+00 : f32
    %77 = vector.broadcast %cst_42 : f32 to vector<10x256xf32>
    %78 = arith.maximumf %76, %77 : vector<10x256xf32>
    %79 = vector.extract_strided_slice %78 {offsets = [0, 0], sizes = [10, 128], strides = [1, 1]} : vector<10x256xf32> to vector<10x128xf32>
    %80 = vector.extract_strided_slice %78 {offsets = [0, 128], sizes = [10, 128], strides = [1, 1]} : vector<10x256xf32> to vector<10x128xf32>
    %81 = arith.maximumf %79, %80 : vector<10x128xf32>
    %82 = vector.shape_cast %81 : vector<10x128xf32> to vector<1x5x2x128xf32>
    %83 = vector.extract_strided_slice %82 {offsets = [0, 0, 0, 0], sizes = [1, 5, 1, 128], strides = [1, 1, 1, 1]} : vector<1x5x2x128xf32> to vector<1x5x1x128xf32>
    %84 = vector.shape_cast %83 : vector<1x5x1x128xf32> to vector<1x5x128xf32>
    %85 = vector.extract_strided_slice %82 {offsets = [0, 0, 1, 0], sizes = [1, 5, 1, 128], strides = [1, 1, 1, 1]} : vector<1x5x2x128xf32> to vector<1x5x1x128xf32>
    %86 = vector.shape_cast %85 : vector<1x5x1x128xf32> to vector<1x5x128xf32>
    %87 = arith.maximumf %84, %86 : vector<1x5x128xf32>
    %88 = arith.truncf %87 : vector<1x5x128xf32> to vector<1x5x128xbf16>
    %89 = vector.extract_strided_slice %88 {offsets = [0, 0, 0], sizes = [1, 1, 128], strides = [1, 1, 1]} : vector<1x5x128xbf16> to vector<1x1x128xbf16>
    %90 = vector.shape_cast %89 : vector<1x1x128xbf16> to vector<1x128xbf16>
    %c0_43 = arith.constant 0 : index
    %c0_44 = arith.constant 0 : index
    %c0_45 = arith.constant 0 : index
    %91 = vector.load %arg6[%c0_43, %c0_44, %c0_45] : memref<5x128x128xbf16, #tpu.memory_space<vmem>>, vector<1x128x128xbf16>
    %92 = vector.shape_cast %91 : vector<1x128x128xbf16> to vector<128x128xbf16>
    %cst_46 = arith.constant dense<0.000000e+00> : vector<1x128xf32>
    %93 = tpu.matmul %90, %92, %cst_46 {dimension_numbers = #tpu.dot_dimension_numbers<[1], [0], [0], [1], [0, 0, 1, 1], [], []>} : vector<1x128xbf16>, vector<128x128xbf16>, vector<1x128xf32> -> vector<1x128xf32>
    %94 = vector.extract_strided_slice %88 {offsets = [0, 1, 0], sizes = [1, 1, 128], strides = [1, 1, 1]} : vector<1x5x128xbf16> to vector<1x1x128xbf16>
    %95 = vector.shape_cast %94 : vector<1x1x128xbf16> to vector<1x128xbf16>
    %c1_47 = arith.constant 1 : index
    %c0_48 = arith.constant 0 : index
    %c0_49 = arith.constant 0 : index
    %96 = vector.load %arg6[%c1_47, %c0_48, %c0_49] : memref<5x128x128xbf16, #tpu.memory_space<vmem>>, vector<1x128x128xbf16>
    %97 = vector.shape_cast %96 : vector<1x128x128xbf16> to vector<128x128xbf16>
    %cst_50 = arith.constant dense<0.000000e+00> : vector<1x128xf32>
    %98 = tpu.matmul %95, %97, %cst_50 {dimension_numbers = #tpu.dot_dimension_numbers<[1], [0], [0], [1], [0, 0, 1, 1], [], []>} : vector<1x128xbf16>, vector<128x128xbf16>, vector<1x128xf32> -> vector<1x128xf32>
    %99 = arith.addf %93, %98 : vector<1x128xf32>
    %100 = vector.extract_strided_slice %88 {offsets = [0, 2, 0], sizes = [1, 1, 128], strides = [1, 1, 1]} : vector<1x5x128xbf16> to vector<1x1x128xbf16>
    %101 = vector.shape_cast %100 : vector<1x1x128xbf16> to vector<1x128xbf16>
    %c2_51 = arith.constant 2 : index
    %c0_52 = arith.constant 0 : index
    %c0_53 = arith.constant 0 : index
    %102 = vector.load %arg6[%c2_51, %c0_52, %c0_53] : memref<5x128x128xbf16, #tpu.memory_space<vmem>>, vector<1x128x128xbf16>
    %103 = vector.shape_cast %102 : vector<1x128x128xbf16> to vector<128x128xbf16>
    %cst_54 = arith.constant dense<0.000000e+00> : vector<1x128xf32>
    %104 = tpu.matmul %101, %103, %cst_54 {dimension_numbers = #tpu.dot_dimension_numbers<[1], [0], [0], [1], [0, 0, 1, 1], [], []>} : vector<1x128xbf16>, vector<128x128xbf16>, vector<1x128xf32> -> vector<1x128xf32>
    %105 = arith.addf %99, %104 : vector<1x128xf32>
    %106 = vector.extract_strided_slice %88 {offsets = [0, 3, 0], sizes = [1, 1, 128], strides = [1, 1, 1]} : vector<1x5x128xbf16> to vector<1x1x128xbf16>
    %107 = vector.shape_cast %106 : vector<1x1x128xbf16> to vector<1x128xbf16>
    %c3_55 = arith.constant 3 : index
    %c0_56 = arith.constant 0 : index
    %c0_57 = arith.constant 0 : index
    %108 = vector.load %arg6[%c3_55, %c0_56, %c0_57] : memref<5x128x128xbf16, #tpu.memory_space<vmem>>, vector<1x128x128xbf16>
    %109 = vector.shape_cast %108 : vector<1x128x128xbf16> to vector<128x128xbf16>
    %cst_58 = arith.constant dense<0.000000e+00> : vector<1x128xf32>
    %110 = tpu.matmul %107, %109, %cst_58 {dimension_numbers = #tpu.dot_dimension_numbers<[1], [0], [0], [1], [0, 0, 1, 1], [], []>} : vector<1x128xbf16>, vector<128x128xbf16>, vector<1x128xf32> -> vector<1x128xf32>
    %111 = arith.addf %105, %110 : vector<1x128xf32>
    %112 = vector.extract_strided_slice %88 {offsets = [0, 4, 0], sizes = [1, 1, 128], strides = [1, 1, 1]} : vector<1x5x128xbf16> to vector<1x1x128xbf16>
    %113 = vector.shape_cast %112 : vector<1x1x128xbf16> to vector<1x128xbf16>
    %c4_59 = arith.constant 4 : index
    %c0_60 = arith.constant 0 : index
    %c0_61 = arith.constant 0 : index
    %114 = vector.load %arg6[%c4_59, %c0_60, %c0_61] : memref<5x128x128xbf16, #tpu.memory_space<vmem>>, vector<1x128x128xbf16>
    %115 = vector.shape_cast %114 : vector<1x128x128xbf16> to vector<128x128xbf16>
    %cst_62 = arith.constant dense<0.000000e+00> : vector<1x128xf32>
    %116 = tpu.matmul %113, %115, %cst_62 {dimension_numbers = #tpu.dot_dimension_numbers<[1], [0], [0], [1], [0, 0, 1, 1], [], []>} : vector<1x128xbf16>, vector<128x128xbf16>, vector<1x128xf32> -> vector<1x128xf32>
    %117 = arith.addf %111, %116 : vector<1x128xf32>
    %c0_63 = arith.constant 0 : index
    %c0_64 = arith.constant 0 : index
    %118 = vector.load %arg7[%c0_63, %c0_64] : memref<1x128xf32, #tpu.memory_space<vmem>>, vector<1x128xf32>
    %119 = arith.addf %117, %118 : vector<1x128xf32>
    %cst_65 = arith.constant 0.000000e+00 : f32
    %120 = vector.broadcast %cst_65 : f32 to vector<1x128xf32>
    %121 = arith.maximumf %119, %120 : vector<1x128xf32>
    %122 = arith.truncf %121 : vector<1x128xf32> to vector<1x128xbf16>
    %c0_66 = arith.constant 0 : index
    %c0_67 = arith.constant 0 : index
    %123 = vector.load %arg8[%c0_66, %c0_67] : memref<128x128xbf16, #tpu.memory_space<vmem>>, vector<128x128xbf16>
    %cst_68 = arith.constant dense<0.000000e+00> : vector<1x128xf32>
    %124 = tpu.matmul %122, %123, %cst_68 {dimension_numbers = #tpu.dot_dimension_numbers<[1], [0], [0], [1], [0, 0, 1, 1], [], []>} : vector<1x128xbf16>, vector<128x128xbf16>, vector<1x128xf32> -> vector<1x128xf32>
    %c0_69 = arith.constant 0 : index
    %c0_70 = arith.constant 0 : index
    %125 = vector.load %arg9[%c0_69, %c0_70] : memref<1x128xf32, #tpu.memory_space<vmem>>, vector<1x128xf32>
    %126 = arith.addf %124, %125 : vector<1x128xf32>
    %cst_71 = arith.constant 0.000000e+00 : f32
    %127 = vector.broadcast %cst_71 : f32 to vector<1x128xf32>
    %128 = arith.maximumf %126, %127 : vector<1x128xf32>
    %129 = arith.truncf %128 : vector<1x128xf32> to vector<1x128xbf16>
    %c0_72 = arith.constant 0 : index
    %c0_73 = arith.constant 0 : index
    %130 = vector.load %arg10[%c0_72, %c0_73] : memref<128x128xbf16, #tpu.memory_space<vmem>>, vector<128x128xbf16>
    %cst_74 = arith.constant dense<0.000000e+00> : vector<1x128xf32>
    %131 = tpu.matmul %129, %130, %cst_74 {dimension_numbers = #tpu.dot_dimension_numbers<[1], [0], [0], [1], [0, 0, 1, 1], [], []>} : vector<1x128xbf16>, vector<128x128xbf16>, vector<1x128xf32> -> vector<1x128xf32>
    %c0_75 = arith.constant 0 : index
    %c0_76 = arith.constant 0 : index
    %132 = vector.load %arg11[%c0_75, %c0_76] : memref<1x128xf32, #tpu.memory_space<vmem>>, vector<1x128xf32>
    %133 = arith.addf %131, %132 : vector<1x128xf32>
    %134 = tpu.iota {dimensions = array<i32: 1>} : vector<1x128xi32>
    %c10_i32 = arith.constant 10 : i32
    %135 = vector.broadcast %c10_i32 : i32 to vector<1x128xi32>
    %136 = arith.cmpi slt, %134, %135 : vector<1x128xi32>
    %cst_77 = arith.constant -1.000000e+30 : f32
    %137 = vector.broadcast %cst_77 : f32 to vector<1x128xf32>
    %138 = arith.select %136, %133, %137 : vector<1x128xi1>, vector<1x128xf32>
    %cst_78 = arith.constant dense<0xFF800000> : vector<1xf32>
    %139 = vector.multi_reduction <maximumf>, %138, %cst_78 [1] : vector<1x128xf32> to vector<1xf32>
    %140 = vector.shape_cast %139 : vector<1xf32> to vector<1x1xf32>
    %141 = vector.broadcast %140 : vector<1x1xf32> to vector<1x128xf32>
    %142 = arith.subf %138, %141 : vector<1x128xf32>
    %143 = math.exp %142 : vector<1x128xf32>
    %cst_79 = arith.constant dense<0.000000e+00> : vector<1xf32>
    %144 = vector.multi_reduction <add>, %143, %cst_79 [1] : vector<1x128xf32> to vector<1xf32>
    %145 = vector.shape_cast %144 : vector<1xf32> to vector<1x1xf32>
    %146 = math.log %145 : vector<1x1xf32>
    %147 = vector.broadcast %146 : vector<1x1xf32> to vector<1x128xf32>
    %148 = arith.subf %142, %147 : vector<1x128xf32>
    %c0_80 = arith.constant 0 : index
    %c0_81 = arith.constant 0 : index
    %c0_82 = arith.constant 0 : index
    %149 = vector.load %arg12[%c0_80, %c0_81, %c0_82] : memref<1x1x128xf32, #tpu.memory_space<vmem>>, vector<1x1x128xf32>
    %150 = vector.shape_cast %149 : vector<1x1x128xf32> to vector<1x128xf32>
    %151 = vector.shape_cast %148 : vector<1x128xf32> to vector<1x1x128xf32>
    tpu.vector_store %arg12[%c0_80, %c0_81, %c0_82], %151 {strides = array<i32>} : memref<1x1x128xf32, #tpu.memory_space<vmem>>, vector<1x1x128xf32>,
    return
  }
  func.func @transform_0(%arg0: i32) -> (i32, i32, i32) {
    %c0_i32 = arith.constant 0 : i32
    %c0_i32_0 = arith.constant 0 : i32
    %c0_i32_1 = arith.constant 0 : i32
    return %arg0, %c0_i32, %c0_i32_0 : i32, i32, i32
  }
  func.func @transform_1(%arg0: i32) -> (i32, i32, i32) {
    %c0_i32 = arith.constant 0 : i32
    %c0_i32_0 = arith.constant 0 : i32
    %c0_i32_1 = arith.constant 0 : i32
    %c0_i32_2 = arith.constant 0 : i32
    return %c0_i32, %c0_i32_0, %c0_i32_1 : i32, i32, i32
  }
  func.func @transform_2(%arg0: i32) -> (i32, i32) {
    %c0_i32 = arith.constant 0 : i32
    %c0_i32_0 = arith.constant 0 : i32
    %c0_i32_1 = arith.constant 0 : i32
    return %c0_i32, %c0_i32_0 : i32, i32
  }
  func.func @transform_3(%arg0: i32) -> (i32, i32, i32) {
    %c0_i32 = arith.constant 0 : i32
    %c0_i32_0 = arith.constant 0 : i32
    %c0_i32_1 = arith.constant 0 : i32
    %c0_i32_2 = arith.constant 0 : i32
    return %c0_i32, %c0_i32_0, %c0_i32_1 : i32, i32, i32
  }
  func.func @transform_4(%arg0: i32) -> (i32, i32) {
    %c0_i32 = arith.constant 0 : i32
    %c0_i32_0 = arith.constant 0 : i32
    %c0_i32_1 = arith.constant 0 : i32
    return %c0_i32, %c0_i32_0 : i32, i32
  }
  func.func @transform_5(%arg0: i32) -> (i32, i32, i32) {
    %c0_i32 = arith.constant 0 : i32
    %c0_i32_0 = arith.constant 0 : i32
    %c0_i32_1 = arith.constant 0 : i32
    %c0_i32_2 = arith.constant 0 : i32
    return %c0_i32, %c0_i32_0, %c0_i32_1 : i32, i32, i32
  }
  func.func @transform_6(%arg0: i32) -> (i32, i32) {
    %c0_i32 = arith.constant 0 : i32
    %c0_i32_0 = arith.constant 0 : i32
    %c0_i32_1 = arith.constant 0 : i32
    return %c0_i32, %c0_i32_0 : i32, i32
  }
  func.func @transform_7(%arg0: i32) -> (i32, i32) {
    %c0_i32 = arith.constant 0 : i32
    %c0_i32_0 = arith.constant 0 : i32
    %c0_i32_1 = arith.constant 0 : i32
    return %c0_i32, %c0_i32_0 : i32, i32
  }
  func.func @transform_8(%arg0: i32) -> (i32, i32) {
    %c0_i32 = arith.constant 0 : i32
    %c0_i32_0 = arith.constant 0 : i32
    %c0_i32_1 = arith.constant 0 : i32
    return %c0_i32, %c0_i32_0 : i32, i32
  }
  func.func @transform_9(%arg0: i32) -> (i32, i32) {
    %c0_i32 = arith.constant 0 : i32
    %c0_i32_0 = arith.constant 0 : i32
    %c0_i32_1 = arith.constant 0 : i32
    return %c0_i32, %c0_i32_0 : i32, i32
  }
  func.func @transform_10(%arg0: i32) -> (i32, i32) {
    %c0_i32 = arith.constant 0 : i32
    %c0_i32_0 = arith.constant 0 : i32
    %c0_i32_1 = arith.constant 0 : i32
    return %c0_i32, %c0_i32_0 : i32, i32
  }
  func.func @transform_11(%arg0: i32) -> (i32, i32, i32) {
    %c0_i32 = arith.constant 0 : i32
    %c0_i32_0 = arith.constant 0 : i32
    %c0_i32_1 = arith.constant 0 : i32
    return %arg0, %c0_i32, %c0_i32_0 : i32, i32, i32
  }
}

</mosaic_0001>

<llo_original>
// kernel: lenet_forward.1
$region0: #{lenet_forward.1}
  #allocation0 [shape = 'u32[]', space=smem, size = 0x4, offset = 0x4, fixed_abs, tag = 'smem constant byte address 0x4 - core index']
  #allocation1 [shape = 'u32[144,128]{1,0:T(1,128)}', space=vmem, size = 0x12000, scoped, tag = 'internal scratch']
  %s0 = inlined_call_operand.vmem [shape: bf16[2,32,32], index: 0, kind: input, shape index: {}]
  %s1 = inlined_call_operand.vmem [shape: bf16[5,32,256], index: 1, kind: input, shape index: {}]
  %s2 = inlined_call_operand.vmem [shape: f32[1,256], index: 2, kind: input, shape index: {}]
  %s3 = inlined_call_operand.hbm [shape: bf16[5,128,256], index: 3, kind: input, shape index: {}]
  %s4 = inlined_call_operand.vmem [shape: f32[1,256], index: 4, kind: input, shape index: {}]
  %s5 = inlined_call_operand.hbm [shape: bf16[5,128,128], index: 5, kind: input, shape index: {}]
  %s6 = inlined_call_operand.vmem [shape: f32[1,128], index: 6, kind: input, shape index: {}]
  %s7 = inlined_call_operand.hbm [shape: bf16[128,128], index: 7, kind: input, shape index: {}]
  %s8 = inlined_call_operand.vmem [shape: f32[1,128], index: 8, kind: input, shape index: {}]
  %s9 = inlined_call_operand.hbm [shape: bf16[128,128], index: 9, kind: input, shape index: {}]
  %s10 = inlined_call_operand.vmem [shape: f32[1,128], index: 10, kind: input, shape index: {}]
  %s11 = inlined_call_operand.hbm [shape: f32[2,1,128], index: 11, kind: output, shape index: {}]
  %s12 = sld [smem:[#allocation0]]
  $region93: #{lenet_forward.1} parent=0
    _
  %s14 = ssub.s32 1, %s12
  %s15 = scalar_select 0, %s14, %s12
  $region1: #{lenet_forward.1} parent=0
    #allocation2 [shape = 'u8[327680]{0}', space=vmem, size = 0x50000, scoped, tag = 'input window, operand 3, single buffered']
    #allocation3 [shape = 's32[2]{0}', space=sflag, size = 0x8, scoped, tag = 'scoped memory for lenet_forward.1']
    #allocation4 [shape = 's32[2]{0}', space=sflag, size = 0x8, scoped, tag = 'scoped memory for lenet_forward.1']
    #allocation5 [shape = 'u8[163840]{0}', space=vmem, size = 0x28000, scoped, tag = 'input window, operand 5, single buffered']
    #allocation6 [shape = 's32[1]{0}', space=sflag, size = 0x4, scoped, tag = 'scoped memory for lenet_forward.1']
    #allocation7 [shape = 'u8[32768]{0}', space=vmem, size = 0x8000, scoped, tag = 'input window, operand 7, single buffered']
    #allocation8 [shape = 'u8[32768]{0}', space=vmem, size = 0x8000, scoped, tag = 'input window, operand 9, single buffered']
    #allocation9 [shape = 's32[1]{0}', space=sflag, size = 0x4, scoped, tag = 'scoped memory for lenet_forward.1']
    #allocation10 [shape = 'u8[1024]{0}', space=vmem, size = 0x400, scoped, tag = 'output window, operand 0']
    %16 = vsyncpa [#allocation3], 0
    %17 = vsyncpa [#allocation6], 0
    %18 = vsyncpa [#allocation9], 0
    %19 = vsyncpa [#allocation4], 0
    %s20 = scalar_lea.sflag [#allocation4], 1
    %21 = vsyncpa %s20, 0
    loop: start=0, step=1, limit=4
    $region2: #{lenet_forward.1} parent=1 // loop_pre_header
      _
    $region3: #{lenet_forward.1} parent=1 // loop_header
      %s23 = sphi 0, %s27
      %p24 = scmp.ge.s32.totalorder %s23, 4
      %s33 = sphi 0, %s35
      %s36 = sphi 0, %s33
      %s37 = sphi 0, %s36
      %s53 = sphi 0, %s37
      %s57 = sphi 0, %s57
      %s59 = sphi 0, %s57
      %s60 = sphi 0, %s59
      %s74 = sphi 0, %s60
      %s78 = sphi 0, %s78
      %s80 = sphi 0, %s78
      %s81 = sphi 0, %s80
      %s95 = sphi 0, %s81
      %s99 = sphi 0, %s99
      %s101 = sphi 0, %s99
      %s102 = sphi 0, %s101
      %s116 = sphi 0, %s102
      %s120 = sphi 0, %s120
      %s122 = sphi 0, %s120
      %s123 = sphi 0, %s122
      %s137 = sphi 0, %s123
      %s141 = sphi 0, %s141
      %s143 = sphi 0, %s141
      %s144 = sphi 0, %s143
      %s158 = sphi 0, %s144
      %s162 = sphi 0, %s162
      %s164 = sphi 0, %s162
      %s165 = sphi 0, %s164
      %s179 = sphi 0, %s165
      %s183 = sphi 0, %s183
      %s185 = sphi 0, %s183
      %s186 = sphi 0, %s185
      %s200 = sphi 0, %s186
      %s204 = sphi 0, %s204
      %s206 = sphi 0, %s204
      %s207 = sphi 0, %s206
      %s221 = sphi 0, %s207
      %s225 = sphi 0, %s225
      %s227 = sphi 0, %s225
      %s228 = sphi 0, %s227
      %s242 = sphi 0, %s228
      %s246 = sphi 0, %s246
      %s248 = sphi 0, %s246
      %s249 = sphi 0, %s248
      %s263 = sphi 0, %s249
      %s269 = sphi 0, %s271
      %s272 = sphi 0, %s269
      %s273 = sphi 0, %s272
      %s289 = sphi 0, %s273
    $region4: #{lenet_forward.1} parent=1 // loop_header_branch
      %26 = sbr.rel (%p24) target = $region8
    $region5: #{lenet_forward.1} parent=1 // loop_body
      %s28 = ssub.s32 %s23, 1
      %s29 = ssub.s32 %s23, 2
      %s30 = sadd.s32 %s23, 1
      %s31 = ssub.s32 %s23, %s30
      %p32 = scmp.eq.s32.totalorder %s31, 0
      %s34 = sadd.s32 %s33, 1
      %s35 = scalar_select %p32, %s33, %s34
      %p38 = pneg %p32
      %p39 = scmp.eq.s32.totalorder %s23, 1
      %p40 = por %p38, %p39
      %p41 = scmp.ne.s32.totalorder %s33, %s36
      %p42 = scmp.eq.s32.totalorder %s23, 0
      %p43 = por %p41, %p42
      %p44 = scmp.ne.s32.totalorder %s33, %s36
      %p45 = scmp.eq.s32.totalorder %s28, 1
      %p46 = por %p44, %p45
      %p47 = scmp.ne.s32.totalorder %s36, %s37
      %p48 = scmp.eq.s32.totalorder %s28, 0
      %p49 = por %p47, %p48
      %p50 = scmp.ne.s32.totalorder %s36, %s37
      %p51 = scmp.eq.s32.totalorder %s29, 1
      %p52 = por %p50, %p51
      %p54 = scmp.ne.s32.totalorder %s37, %s53
      %p55 = scmp.eq.s32.totalorder %s29, 0
      %p56 = por %p54, %p55
      %s58 = sadd.s32 %s57, 1
      %p61 = scmp.eq.s32.totalorder %s23, 1
      %p62 = scmp.ne.s32.totalorder %s57, %s59
      %p63 = scmp.eq.s32.totalorder %s23, 0
      %p64 = por %p62, %p63
      %p65 = scmp.ne.s32.totalorder %s57, %s59
      %p66 = scmp.eq.s32.totalorder %s28, 1
      %p67 = por %p65, %p66
      %p68 = scmp.ne.s32.totalorder %s59, %s60
      %p69 = scmp.eq.s32.totalorder %s28, 0
      %p70 = por %p68, %p69
      %p71 = scmp.ne.s32.totalorder %s59, %s60
      %p72 = scmp.eq.s32.totalorder %s29, 1
      %p73 = por %p71, %p72
      %p75 = scmp.ne.s32.totalorder %s60, %s74
      %p76 = scmp.eq.s32.totalorder %s29, 0
      %p77 = por %p75, %p76
      %s79 = sadd.s32 %s78, 1
      %p82 = scmp.eq.s32.totalorder %s23, 1
      %p83 = scmp.ne.s32.totalorder %s78, %s80
      %p84 = scmp.eq.s32.totalorder %s23, 0
      %p85 = por %p83, %p84
      %p86 = scmp.ne.s32.totalorder %s78, %s80
      %p87 = scmp.eq.s32.totalorder %s28, 1
      %p88 = por %p86, %p87
      %p89 = scmp.ne.s32.totalorder %s80, %s81
      %p90 = scmp.eq.s32.totalorder %s28, 0
      %p91 = por %p89, %p90
      %p92 = scmp.ne.s32.totalorder %s80, %s81
      %p93 = scmp.eq.s32.totalorder %s29, 1
      %p94 = por %p92, %p93
      %p96 = scmp.ne.s32.totalorder %s81, %s95
      %p97 = scmp.eq.s32.totalorder %s29, 0
      %p98 = por %p96, %p97
      %s100 = sadd.s32 %s99, 1
      %p103 = scmp.eq.s32.totalorder %s23, 1
      %p104 = scmp.ne.s32.totalorder %s99, %s101
      %p105 = scmp.eq.s32.totalorder %s23, 0
      %p106 = por %p104, %p105
      %p107 = scmp.ne.s32.totalorder %s99, %s101
      %p108 = scmp.eq.s32.totalorder %s28, 1
      %p109 = por %p107, %p108
      %p110 = scmp.ne.s32.totalorder %s101, %s102
      %p111 = scmp.eq.s32.totalorder %s28, 0
      %p112 = por %p110, %p111
      %p113 = scmp.ne.s32.totalorder %s101, %s102
      %p114 = scmp.eq.s32.totalorder %s29, 1
      %p115 = por %p113, %p114
      %p117 = scmp.ne.s32.totalorder %s102, %s116
      %p118 = scmp.eq.s32.totalorder %s29, 0
      %p119 = por %p117, %p118
      %s121 = sadd.s32 %s120, 1
      %p124 = scmp.eq.s32.totalorder %s23, 1
      %p125 = scmp.ne.s32.totalorder %s120, %s122
      %p126 = scmp.eq.s32.totalorder %s23, 0
      %p127 = por %p125, %p126
      %p128 = scmp.ne.s32.totalorder %s120, %s122
      %p129 = scmp.eq.s32.totalorder %s28, 1
      %p130 = por %p128, %p129
      %p131 = scmp.ne.s32.totalorder %s122, %s123
      %p132 = scmp.eq.s32.totalorder %s28, 0
      %p133 = por %p131, %p132
      %p134 = scmp.ne.s32.totalorder %s122, %s123
      %p135 = scmp.eq.s32.totalorder %s29, 1
      %p136 = por %p134, %p135
      %p138 = scmp.ne.s32.totalorder %s123, %s137
      %p139 = scmp.eq.s32.totalorder %s29, 0
      %p140 = por %p138, %p139
      %s142 = sadd.s32 %s141, 1
      %p145 = scmp.eq.s32.totalorder %s23, 1
      %p146 = scmp.ne.s32.totalorder %s141, %s143
      %p147 = scmp.eq.s32.totalorder %s23, 0
      %p148 = por %p146, %p147
      %p149 = scmp.ne.s32.totalorder %s141, %s143
      %p150 = scmp.eq.s32.totalorder %s28, 1
      %p151 = por %p149, %p150
      %p152 = scmp.ne.s32.totalorder %s143, %s144
      %p153 = scmp.eq.s32.totalorder %s28, 0
      %p154 = por %p152, %p153
      %p155 = scmp.ne.s32.totalorder %s143, %s144
      %p156 = scmp.eq.s32.totalorder %s29, 1
      %p157 = por %p155, %p156
      %p159 = scmp.ne.s32.totalorder %s144, %s158
      %p160 = scmp.eq.s32.totalorder %s29, 0
      %p161 = por %p159, %p160
      %s163 = sadd.s32 %s162, 1
      %p166 = scmp.eq.s32.totalorder %s23, 1
      %p167 = scmp.ne.s32.totalorder %s162, %s164
      %p168 = scmp.eq.s32.totalorder %s23, 0
      %p169 = por %p167, %p168
      %p170 = scmp.ne.s32.totalorder %s162, %s164
      %p171 = scmp.eq.s32.totalorder %s28, 1
      %p172 = por %p170, %p171
      %p173 = scmp.ne.s32.totalorder %s164, %s165
      %p174 = scmp.eq.s32.totalorder %s28, 0
      %p175 = por %p173, %p174
      %p176 = scmp.ne.s32.totalorder %s164, %s165
      %p177 = scmp.eq.s32.totalorder %s29, 1
      %p178 = por %p176, %p177
      %p180 = scmp.ne.s32.totalorder %s165, %s179
      %p181 = scmp.eq.s32.totalorder %s29, 0
      %p182 = por %p180, %p181
      %s184 = sadd.s32 %s183, 1
      %p187 = scmp.eq.s32.totalorder %s23, 1
      %p188 = scmp.ne.s32.totalorder %s183, %s185
      %p189 = scmp.eq.s32.totalorder %s23, 0
      %p190 = por %p188, %p189
      %p191 = scmp.ne.s32.totalorder %s183, %s185
      %p192 = scmp.eq.s32.totalorder %s28, 1
      %p193 = por %p191, %p192
      %p194 = scmp.ne.s32.totalorder %s185, %s186
      %p195 = scmp.eq.s32.totalorder %s28, 0
      %p196 = por %p194, %p195
      %p197 = scmp.ne.s32.totalorder %s185, %s186
      %p198 = scmp.eq.s32.totalorder %s29, 1
      %p199 = por %p197, %p198
      %p201 = scmp.ne.s32.totalorder %s186, %s200
      %p202 = scmp.eq.s32.totalorder %s29, 0
      %p203 = por %p201, %p202
      %s205 = sadd.s32 %s204, 1
      %p208 = scmp.eq.s32.totalorder %s23, 1
      %p209 = scmp.ne.s32.totalorder %s204, %s206
      %p210 = scmp.eq.s32.totalorder %s23, 0
      %p211 = por %p209, %p210
      %p212 = scmp.ne.s32.totalorder %s204, %s206
      %p213 = scmp.eq.s32.totalorder %s28, 1
      %p214 = por %p212, %p213
      %p215 = scmp.ne.s32.totalorder %s206, %s207
      %p216 = scmp.eq.s32.totalorder %s28, 0
      %p217 = por %p215, %p216
      %p218 = scmp.ne.s32.totalorder %s206, %s207
      %p219 = scmp.eq.s32.totalorder %s29, 1
      %p220 = por %p218, %p219
      %p222 = scmp.ne.s32.totalorder %s207, %s221
      %p223 = scmp.eq.s32.totalorder %s29, 0
      %p224 = por %p222, %p223
      %s226 = sadd.s32 %s225, 1
      %p229 = scmp.eq.s32.totalorder %s23, 1
      %p230 = scmp.ne.s32.totalorder %s225, %s227
      %p231 = scmp.eq.s32.totalorder %s23, 0
      %p232 = por %p230, %p231
      %p233 = scmp.ne.s32.totalorder %s225, %s227
      %p234 = scmp.eq.s32.totalorder %s28, 1
      %p235 = por %p233, %p234
      %p236 = scmp.ne.s32.totalorder %s227, %s228
      %p237 = scmp.eq.s32.totalorder %s28, 0
      %p238 = por %p236, %p237
      %p239 = scmp.ne.s32.totalorder %s227, %s228
      %p240 = scmp.eq.s32.totalorder %s29, 1
      %p241 = por %p239, %p240
      %p243 = scmp.ne.s32.totalorder %s228, %s242
      %p244 = scmp.eq.s32.totalorder %s29, 0
      %p245 = por %p243, %p244
      %s247 = sadd.s32 %s246, 1
      %p250 = scmp.eq.s32.totalorder %s23, 1
      %p251 = scmp.ne.s32.totalorder %s246, %s248
      %p252 = scmp.eq.s32.totalorder %s23, 0
      %p253 = por %p251, %p252
      %p254 = scmp.ne.s32.totalorder %s246, %s248
      %p255 = scmp.eq.s32.totalorder %s28, 1
      %p256 = por %p254, %p255
      %p257 = scmp.ne.s32.totalorder %s248, %s249
      %p258 = scmp.eq.s32.totalorder %s28, 0
      %p259 = por %p257, %p258
      %p260 = scmp.ne.s32.totalorder %s248, %s249
      %p261 = scmp.eq.s32.totalorder %s29, 1
      %p262 = por %p260, %p261
      %p264 = scmp.ne.s32.totalorder %s249, %s263
      %p265 = scmp.eq.s32.totalorder %s29, 0
      %p266 = por %p264, %p265
      %s267 = ssub.s32 %s23, %s30
      %p268 = scmp.eq.s32.totalorder %s267, 0
      %s270 = sadd.s32 %s269, 1
      %s271 = scalar_select %p268, %s269, %s270
      %p274 = pneg %p268
      %p275 = scmp.eq.s32.totalorder %s23, 1
      %p276 = por %p274, %p275
      %p277 = scmp.ne.s32.totalorder %s269, %s272
      %p278 = scmp.eq.s32.totalorder %s23, 0
      %p279 = por %p277, %p278
      %p280 = scmp.ne.s32.totalorder %s269, %s272
      %p281 = scmp.eq.s32.totalorder %s28, 1
      %p282 = por %p280, %p281
      %p283 = scmp.ne.s32.totalorder %s272, %s273
      %p284 = scmp.eq.s32.totalorder %s28, 0
      %p285 = por %p283, %p284
      %p286 = scmp.ne.s32.totalorder %s272, %s273
      %p287 = scmp.eq.s32.totalorder %s29, 1
      %p288 = por %p286, %p287
      %p290 = scmp.ne.s32.totalorder %s273, %s289
      %p291 = scmp.eq.s32.totalorder %s29, 0
      %p292 = por %p290, %p291
      %p293 = scmp.le.s32.totalorder 1, %s23
      %p294 = scmp.lt.s32.totalorder %s23, 3
      %p295 = pnand %p293, %p294
      %p296 = pneg %p295
      // Predicated region
      $region9: #{lenet_forward.1} parent=5 // pred_check
        _
      $region10: #{lenet_forward.1} parent=5 // pred_check_branch
        %298 = sbr.rel (%p295) target = $region12
      $region11: #{lenet_forward.1} parent=5 // pred_region
        %s299 = ssub.s32 %s23, 1
        // Predicated region
        $region13: #{lenet_forward.1} parent=11 // pred_check
          %p300 = pneg %p70
        $region14: #{lenet_forward.1} parent=11 // pred_check_branch
          %302 = sbr.rel (%p300) target = $region16
        $region15: #{lenet_forward.1} parent=11 // pred_region
          _
        $region16: #{lenet_forward.1} parent=11 // pred_fallthru
          _
        // Predicated region
        $region17: #{lenet_forward.1} parent=11 // pred_check
          %p303 = pneg %p91
        $region18: #{lenet_forward.1} parent=11 // pred_check_branch
          %305 = sbr.rel (%p303) target = $region20
        $region19: #{lenet_forward.1} parent=11 // pred_region
          _
        $region20: #{lenet_forward.1} parent=11 // pred_fallthru
          _
        // Predicated region
        $region21: #{lenet_forward.1} parent=11 // pred_check
          %p306 = pneg %p112
        $region22: #{lenet_forward.1} parent=11 // pred_check_branch
          %308 = sbr.rel (%p306) target = $region24
        $region23: #{lenet_forward.1} parent=11 // pred_region
          %s310 = ssub.s32 10240, 10240
          %311 = vsyncadd [#allocation3], %s310
          %s312 = sshll.u32 [#allocation2], 4
          %s313 = int_to_ptr.vmem [resolvable:$true] %s312
          %318 = dma.hbm_to_vmem [thread:$0]  %s3, 10240, %s313, [#allocation3], 128, 128, 8
        $region24: #{lenet_forward.1} parent=11 // pred_fallthru
          _
        // Predicated region
        $region25: #{lenet_forward.1} parent=11 // pred_check
          %p319 = pneg %p133
        $region26: #{lenet_forward.1} parent=11 // pred_check_branch
          %321 = sbr.rel (%p319) target = $region28
        $region27: #{lenet_forward.1} parent=11 // pred_region
          _
        $region28: #{lenet_forward.1} parent=11 // pred_fallthru
          _
        // Predicated region
        $region29: #{lenet_forward.1} parent=11 // pred_check
          %p322 = pneg %p154
        $region30: #{lenet_forward.1} parent=11 // pred_check_branch
          %324 = sbr.rel (%p322) target = $region32
        $region31: #{lenet_forward.1} parent=11 // pred_region
          %s326 = ssub.s32 5120, 5120
          %327 = vsyncadd [#allocation6], %s326
          %s328 = sshll.u32 [#allocation5], 4
          %s329 = int_to_ptr.vmem [resolvable:$true] %s328
          %334 = dma.hbm_to_vmem [thread:$0]  %s5, 5120, %s329, [#allocation6], 64, 64, 4
        $region32: #{lenet_forward.1} parent=11 // pred_fallthru
          _
        // Predicated region
        $region33: #{lenet_forward.1} parent=11 // pred_check
          %p335 = pneg %p175
        $region34: #{lenet_forward.1} parent=11 // pred_check_branch
          %337 = sbr.rel (%p335) target = $region36
        $region35: #{lenet_forward.1} parent=11 // pred_region
          _
        $region36: #{lenet_forward.1} parent=11 // pred_fallthru
          _
        // Predicated region
        $region37: #{lenet_forward.1} parent=11 // pred_check
          %p338 = pneg %p196
        $region38: #{lenet_forward.1} parent=11 // pred_check_branch
          %340 = sbr.rel (%p338) target = $region40
        $region39: #{lenet_forward.1} parent=11 // pred_region
          %s342 = ssub.s32 1024, 1024
          %343 = vsyncadd [#allocation6], %s342
          %s344 = sshll.u32 [#allocation7], 4
          %s345 = int_to_ptr.vmem [resolvable:$true] %s344
          %350 = dma.hbm_to_vmem [thread:$0]  %s7, 1024, %s345, [#allocation6], 64, 64, 4
        $region40: #{lenet_forward.1} parent=11 // pred_fallthru
          _
        // Predicated region
        $region41: #{lenet_forward.1} parent=11 // pred_check
          %p351 = pneg %p217
        $region42: #{lenet_forward.1} parent=11 // pred_check_branch
          %353 = sbr.rel (%p351) target = $region44
        $region43: #{lenet_forward.1} parent=11 // pred_region
          _
        $region44: #{lenet_forward.1} parent=11 // pred_fallthru
          _
        // Predicated region
        $region45: #{lenet_forward.1} parent=11 // pred_check
          %p354 = pneg %p238
        $region46: #{lenet_forward.1} parent=11 // pred_check_branch
          %356 = sbr.rel (%p354) target = $region48
        $region47: #{lenet_forward.1} parent=11 // pred_region
          %s358 = ssub.s32 1024, 1024
          %359 = vsyncadd [#allocation9], %s358
          %s360 = sshll.u32 [#allocation8], 4
          %s361 = int_to_ptr.vmem [resolvable:$true] %s360
          %366 = dma.hbm_to_vmem [thread:$0]  %s9, 1024, %s361, [#allocation9], 64, 64, 4
        $region48: #{lenet_forward.1} parent=11 // pred_fallthru
          _
        // Predicated region
        $region49: #{lenet_forward.1} parent=11 // pred_check
          %p367 = pneg %p259
        $region50: #{lenet_forward.1} parent=11 // pred_check_branch
          %369 = sbr.rel (%p367) target = $region52
        $region51: #{lenet_forward.1} parent=11 // pred_region
          _
        $region52: #{lenet_forward.1} parent=11 // pred_fallthru
          _
      $region12: #{lenet_forward.1} parent=5 // pred_fallthru
        _
      %p370 = scmp.lt.s32.totalorder %s23, 2
      // Predicated region
      $region53: #{lenet_forward.1} parent=5 // pred_check
        %p371 = pneg %p370
      $region54: #{lenet_forward.1} parent=5 // pred_check_branch
        %373 = sbr.rel (%p371) target = $region56
      $region55: #{lenet_forward.1} parent=5 // pred_region
        // Predicated region
        $region57: #{lenet_forward.1} parent=55 // pred_check
          %p374 = pneg %p43
        $region58: #{lenet_forward.1} parent=55 // pred_check_branch
          %376 = sbr.rel (%p374) target = $region60
        $region59: #{lenet_forward.1} parent=55 // pred_region
          %p377 = scmp.lt.s32.totalorder %s23, 1
          %s378 = scalar_select %p377, %s23, 1
          %s379 = smul.addr %s378, 4
          %s380 = smul.addr %s379, 4
          %s381 = scalar_lea.vmem %s0, %s380
        $region60: #{lenet_forward.1} parent=55 // pred_fallthru
          _
      $region56: #{lenet_forward.1} parent=5 // pred_fallthru
        _
      %p382 = scmp.le.s32.totalorder 1, %s23
      %p383 = scmp.lt.s32.totalorder %s23, 3
      %p384 = pnand %p382, %p383
      %p385 = pneg %p384
      // Predicated region
      $region61: #{lenet_forward.1} parent=5 // pred_check
        _
      $region62: #{lenet_forward.1} parent=5 // pred_check_branch
        %387 = sbr.rel (%p384) target = $region64
      $region63: #{lenet_forward.1} parent=5 // pred_region
        %s388 = ssub.s32 %s23, 1
        // Predicated region
        $region65: #{lenet_forward.1} parent=63 // pred_check
          %p389 = pneg %p112
        $region66: #{lenet_forward.1} parent=63 // pred_check_branch
          %391 = sbr.rel (%p389) target = $region68
        $region67: #{lenet_forward.1} parent=63 // pred_region
          %392 = dma.done [#allocation3], 10240
        $region68: #{lenet_forward.1} parent=63 // pred_fallthru
          _
        // Predicated region
        $region69: #{lenet_forward.1} parent=63 // pred_check
          %p393 = pneg %p154
        $region70: #{lenet_forward.1} parent=63 // pred_check_branch
          %395 = sbr.rel (%p393) target = $region72
        $region71: #{lenet_forward.1} parent=63 // pred_region
          %396 = dma.done [#allocation6], 5120
        $region72: #{lenet_forward.1} parent=63 // pred_fallthru
          _
        // Predicated region
        $region73: #{lenet_forward.1} parent=63 // pred_check
          %p397 = pneg %p196
        $region74: #{lenet_forward.1} parent=63 // pred_check_branch
          %399 = sbr.rel (%p397) target = $region76
        $region75: #{lenet_forward.1} parent=63 // pred_region
          %400 = dma.done [#allocation6], 1024
        $region76: #{lenet_forward.1} parent=63 // pred_fallthru
          _
        // Predicated region
        $region77: #{lenet_forward.1} parent=63 // pred_check
          %p401 = pneg %p238
        $region78: #{lenet_forward.1} parent=63 // pred_check_branch
          %403 = sbr.rel (%p401) target = $region80
        $region79: #{lenet_forward.1} parent=63 // pred_region
          %404 = dma.done [#allocation9], 1024
        $region80: #{lenet_forward.1} parent=63 // pred_fallthru
          _
        %p405 = scmp.lt.s32.totalorder %s28, 1
        %s406 = scalar_select %p405, %s28, 1
        %s407 = smul.addr %s406, 4
        %s408 = smul.addr %s407, 4
        %s409 = scalar_lea.vmem %s0, %s408
        %p410 = pneg %p49
        %p411 = pneg %p46
        %p412 = pneg %p70
        %p413 = pneg %p67
        %p414 = pneg %p91
        %p415 = pneg %p88
        %p416 = pneg %p112
        %p417 = pneg %p109
        %p418 = pneg %p133
        %p419 = pneg %p130
        %p420 = pneg %p154
        %p421 = pneg %p151
        %p422 = pneg %p175
        %p423 = pneg %p172
        %p424 = pneg %p196
        %p425 = pneg %p193
        %p426 = pneg %p217
        %p427 = pneg %p214
        %p428 = pneg %p238
        %p429 = pneg %p235
        %p430 = pneg %p259
        %p431 = pneg %p256
        %p432 = pneg %p285
        %p433 = pneg %p282
        %s434 = sand.u32 %s272, 1
        %s435 = scalar_lea.sflag [#allocation4], %s434
        %s436 = sand.u32 %s272, 1
        %s437 = scalar_lea.vmem [#allocation10], %s436
        %p438 = scmp.lt.s32.totalorder %s28, 1
        %s439 = scalar_select %p438, %s28, 1
        %s440 = smul.addr %s439, 4
        %s441 = smul.addr %s440, 4
        %s442 = scalar_lea.vmem %s0, %s441
        %v444 = vld [vmem:[%s442] sm:$0xf]
        %v445 = vld [vmem:[%s442 + $0x4] sm:$0xf]
        %v446 = vld [vmem:[%s442 + $0x8] sm:$0xf]
        %v447 = vld [vmem:[%s442 + $0xc] sm:$0xf]
        %v448 = vld [vmem:[%s1] sm:$0xff]
        %v449 = vld [vmem:[%s1 + $0x8] sm:$0xff]
        %v450 = vld [vmem:[%s1 + $0x10] sm:$0xff]
        %v451 = vld [vmem:[%s1 + $0x18] sm:$0xff]
        %s452 = scalar_lea.vmem %s1, 32
        %v453 = vld [vmem:[%s452] sm:$0xff]
        %v454 = vld [vmem:[%s452 + $0x8] sm:$0xff]
        %v455 = vld [vmem:[%s452 + $0x10] sm:$0xff]
        %v456 = vld [vmem:[%s452 + $0x18] sm:$0xff]
        %v461 = vunpack.c.l.b16 %v444
        %v462 = vunpack.c.l.b16 %v445
        %v463 = vunpack.c.l.b16 %v446
        %v464 = vunpack.c.l.b16 %v447
        %v465 = vpack.c.b16 %v462, %v461
        %v466 = vpack.c.b16 %v464, %v463
        %vm467 = vsmask.f32 7424
        %v469 = vshrl.u32 %v465, 16
        %v471 = vshll.u32 %v465, 16
        %v473 = vrot.slane %v471, 1
        %v474 = vor.u32 %v469, %v473
        %v476 = vshll.u32 %v466, 16
        %v478 = vrot.slane %v476, 1
        %v479 = vsel %vm467, %v474, %v478
        %v480 = vshrl.u32 %v466, 16
        %v482 = vor.u32 %v480, %v478
        %v487 = vunpack.c.l.b16 %v453
        %v488 = vunpack.c.h.b16 %v453
        %v489 = vunpack.c.l.b16 %v454
        %v490 = vunpack.c.h.b16 %v454
        %v491 = vunpack.c.l.b16 %v455
        %v492 = vunpack.c.h.b16 %v455
        %v493 = vunpack.c.l.b16 %v456
        %v494 = vunpack.c.h.b16 %v456
        %v495 = vpack.c.b16 %v489, %v487
        %v496 = vpack.c.b16 %v490, %v488
        %v497 = vpack.c.b16 %v493, %v491
        %v498 = vpack.c.b16 %v494, %v492
        %vm503 = vcmask 261120
        %v505 = vsel %vm503, %v479, 0
        %v508 = vsel %vm503, %v482, 0
        %510 = vmatprep.subr.bf16.mxu0 %v496
        %511 = vmatpush1.bf16.msra.mxu0 %v495
        %512 = vmatprep.subr.bf16.mxu0 %v498
        %513 = vmatpush1.bf16.msra.mxu0 %v497
        %514 = vmatprep.subr.bf16.mxu0 0
        %515 = vmatpush1.bf16.msra.mxu0 0
        %516 = vmatprep.subr.bf16.mxu0 0
        %517 = vmatpush1.bf16.msra.mxu0 0
        %518 = vmatprep.subr.bf16.mxu0 0
        %519 = vmatpush1.bf16.msra.mxu0 0
        %520 = vmatprep.subr.bf16.mxu0 0
        %521 = vmatpush1.bf16.msra.mxu0 0
        %522 = vmatprep.subr.bf16.mxu0 0
        %523 = vmatpush1.bf16.msra.mxu0 0
        %524 = vmatprep.subr.bf16.mxu0 0
        %525 = vmatpush1.bf16.msra.mxu0 0
        %526 = vmatprep.subr.bf16.mxu0 0
        %527 = vmatpush1.bf16.msra.mxu0 0
        %528 = vmatprep.subr.bf16.mxu0 0
        %529 = vmatpush1.bf16.msra.mxu0 0
        %530 = vmatprep.subr.bf16.mxu0 0
        %531 = vmatpush1.bf16.msra.mxu0 0
        %532 = vmatprep.subr.bf16.mxu0 0
        %533 = vmatpush1.bf16.msra.mxu0 0
        %534 = vmatprep.subr.bf16.mxu0 0
        %535 = vmatpush1.bf16.msra.mxu0 0
        %536 = vmatprep.subr.bf16.mxu0 0
        %537 = vmatpush1.bf16.msra.mxu0 0
        %538 = vmatprep.subr.bf16.mxu0 0
        %539 = vmatpush1.bf16.msra.mxu0 0
        %540 = vmatprep.subr.bf16.mxu0 0
        %541 = vmatpush1.bf16.msra.mxu0 0
        %542 = vmatprep.mubr.bf16.mxu0 0
        %543 = vmatmul.mubr.bf16.gmra.mrb[0].mxu0 %v505
        %v544 = vpop.f32.mrb[0].mxu0
        %v545 = vadd.f32 0.0, %v544
        %v546 = vpop.f32.mrb[0].mxu0
        %v547 = vadd.f32 0.0, %v546
        %v548 = vpop.f32.mrb[0].mxu0
        %v549 = vadd.f32 0.0, %v548
        %v550 = vpop.f32.mrb[0].mxu0
        %v551 = vadd.f32 0.0, %v550
        %552 = vmatprep.mubr.bf16.mxu0 0
        %553 = vmatmul.mubr.bf16.gmra.mrb[0].mxu0 %v508
        %v554 = vpop.f32.mrb[0].mxu0
        %v555 = vadd.f32 0.0, %v554
        %v556 = vpop.f32.mrb[0].mxu0
        %v557 = vadd.f32 0.0, %v556
        %v558 = vpop.f32.mrb[0].mxu0
        %v559 = vadd.f32 0.0, %v558
        %v560 = vpop.f32.mrb[0].mxu0
        %v561 = vadd.f32 0.0, %v560
        %562 = vdwg.mxu0
        %v567 = vunpack.c.l.b16 %v448
        %v568 = vunpack.c.h.b16 %v448
        %v569 = vunpack.c.l.b16 %v449
        %v570 = vunpack.c.h.b16 %v449
        %v571 = vunpack.c.l.b16 %v450
        %v572 = vunpack.c.h.b16 %v450
        %v573 = vunpack.c.l.b16 %v451
        %v574 = vunpack.c.h.b16 %v451
        %v575 = vpack.c.b16 %v569, %v567
        %v576 = vpack.c.b16 %v570, %v568
        %v577 = vpack.c.b16 %v573, %v571
        %v578 = vpack.c.b16 %v574, %v572
        %v583 = vsel %vm503, %v465, 0
        %v585 = vsel %vm503, %v466, 0
        %587 = vmatprep.subr.bf16.mxu0 %v576
        %588 = vmatpush1.bf16.msra.mxu0 %v575
        %589 = vmatprep.subr.bf16.mxu0 %v578
        %590 = vmatpush1.bf16.msra.mxu0 %v577
        %591 = vmatprep.subr.bf16.mxu0 0
        %592 = vmatpush1.bf16.msra.mxu0 0
        %593 = vmatprep.subr.bf16.mxu0 0
        %594 = vmatpush1.bf16.msra.mxu0 0
        %595 = vmatprep.subr.bf16.mxu0 0
        %596 = vmatpush1.bf16.msra.mxu0 0
        %597 = vmatprep.subr.bf16.mxu0 0
        %598 = vmatpush1.bf16.msra.mxu0 0
        %599 = vmatprep.subr.bf16.mxu0 0
        %600 = vmatpush1.bf16.msra.mxu0 0
        %601 = vmatprep.subr.bf16.mxu0 0
        %602 = vmatpush1.bf16.msra.mxu0 0
        %603 = vmatprep.subr.bf16.mxu0 0
        %604 = vmatpush1.bf16.msra.mxu0 0
        %605 = vmatprep.subr.bf16.mxu0 0
        %606 = vmatpush1.bf16.msra.mxu0 0
        %607 = vmatprep.subr.bf16.mxu0 0
        %608 = vmatpush1.bf16.msra.mxu0 0
        %609 = vmatprep.subr.bf16.mxu0 0
        %610 = vmatpush1.bf16.msra.mxu0 0
        %611 = vmatprep.subr.bf16.mxu0 0
        %612 = vmatpush1.bf16.msra.mxu0 0
        %613 = vmatprep.subr.bf16.mxu0 0
        %614 = vmatpush1.bf16.msra.mxu0 0
        %615 = vmatprep.subr.bf16.mxu0 0
        %616 = vmatpush1.bf16.msra.mxu0 0
        %617 = vmatprep.subr.bf16.mxu0 0
        %618 = vmatpush1.bf16.msra.mxu0 0
        %619 = vmatprep.mubr.bf16.mxu0 0
        %620 = vmatmul.mubr.bf16.gmra.mrb[0].mxu0 %v583
        %v621 = vpop.f32.mrb[0].mxu0
        %v622 = vadd.f32 %v545, %v621
        %v623 = vpop.f32.mrb[0].mxu0
        %v624 = vadd.f32 %v547, %v623
        %v625 = vpop.f32.mrb[0].mxu0
        %v626 = vadd.f32 %v549, %v625
        %v627 = vpop.f32.mrb[0].mxu0
        %v628 = vadd.f32 %v551, %v627
        %629 = vmatprep.mubr.bf16.mxu0 0
        %630 = vmatmul.mubr.bf16.gmra.mrb[0].mxu0 %v585
        %v631 = vpop.f32.mrb[0].mxu0
        %v632 = vadd.f32 %v555, %v631
        %v633 = vpop.f32.mrb[0].mxu0
        %v634 = vadd.f32 %v557, %v633
        %v635 = vpop.f32.mrb[0].mxu0
        %v636 = vadd.f32 %v559, %v635
        %v637 = vpop.f32.mrb[0].mxu0
        %v638 = vadd.f32 %v561, %v637
        %639 = vdwg.mxu0
        %s640 = scalar_lea.vmem %s1, 64
        %v641 = vld [vmem:[%s640] sm:$0xff]
        %v642 = vld [vmem:[%s640 + $0x8] sm:$0xff]
        %v643 = vld [vmem:[%s640 + $0x10] sm:$0xff]
        %v644 = vld [vmem:[%s640 + $0x18] sm:$0xff]
        %vm645 = vcmask 1046528
        %v646 = vrot.slane %v465, 1
        %v647 = vrot.slane %v466, 1
        %v648 = vsel %vm645, %v646, %v647
        %v653 = vunpack.c.l.b16 %v641
        %v654 = vunpack.c.h.b16 %v641
        %v655 = vunpack.c.l.b16 %v642
        %v656 = vunpack.c.h.b16 %v642
        %v657 = vunpack.c.l.b16 %v643
        %v658 = vunpack.c.h.b16 %v643
        %v659 = vunpack.c.l.b16 %v644
        %v660 = vunpack.c.h.b16 %v644
        %v661 = vpack.c.b16 %v655, %v653
        %v662 = vpack.c.b16 %v656, %v654
        %v663 = vpack.c.b16 %v659, %v657
        %v664 = vpack.c.b16 %v660, %v658
        %v670 = vsel %vm503, %v648, 0
        %v673 = vsel %vm503, %v647, 0
        %675 = vmatprep.subr.bf16.mxu0 %v662
        %676 = vmatpush1.bf16.msra.mxu0 %v661
        %677 = vmatprep.subr.bf16.mxu0 %v664
        %678 = vmatpush1.bf16.msra.mxu0 %v663
        %679 = vmatprep.subr.bf16.mxu0 0
        %680 = vmatpush1.bf16.msra.mxu0 0
        %681 = vmatprep.subr.bf16.mxu0 0
        %682 = vmatpush1.bf16.msra.mxu0 0
        %683 = vmatprep.subr.bf16.mxu0 0
        %684 = vmatpush1.bf16.msra.mxu0 0
        %685 = vmatprep.subr.bf16.mxu0 0
        %686 = vmatpush1.bf16.msra.mxu0 0
        %687 = vmatprep.subr.bf16.mxu0 0
        %688 = vmatpush1.bf16.msra.mxu0 0
        %689 = vmatprep.subr.bf16.mxu0 0
        %690 = vmatpush1.bf16.msra.mxu0 0
        %691 = vmatprep.subr.bf16.mxu0 0
        %692 = vmatpush1.bf16.msra.mxu0 0
        %693 = vmatprep.subr.bf16.mxu0 0
        %694 = vmatpush1.bf16.msra.mxu0 0
        %695 = vmatprep.subr.bf16.mxu0 0
        %696 = vmatpush1.bf16.msra.mxu0 0
        %697 = vmatprep.subr.bf16.mxu0 0
        %698 = vmatpush1.bf16.msra.mxu0 0
        %699 = vmatprep.subr.bf16.mxu0 0
        %700 = vmatpush1.bf16.msra.mxu0 0
        %701 = vmatprep.subr.bf16.mxu0 0
        %702 = vmatpush1.bf16.msra.mxu0 0
        %703 = vmatprep.subr.bf16.mxu0 0
        %704 = vmatpush1.bf16.msra.mxu0 0
        %705 = vmatprep.subr.bf16.mxu0 0
        %706 = vmatpush1.bf16.msra.mxu0 0
        %707 = vmatprep.mubr.bf16.mxu0 0
        %708 = vmatmul.mubr.bf16.gmra.mrb[0].mxu0 %v670
        %v709 = vpop.f32.mrb[0].mxu0
        %v710 = vadd.f32 0.0, %v709
        %v711 = vpop.f32.mrb[0].mxu0
        %v712 = vadd.f32 0.0, %v711
        %v713 = vpop.f32.mrb[0].mxu0
        %v714 = vadd.f32 0.0, %v713
        %v715 = vpop.f32.mrb[0].mxu0
        %v716 = vadd.f32 0.0, %v715
        %717 = vmatprep.mubr.bf16.mxu0 0
        %718 = vmatmul.mubr.bf16.gmra.mrb[0].mxu0 %v673
        %v719 = vpop.f32.mrb[0].mxu0
        %v720 = vadd.f32 0.0, %v719
        %v721 = vpop.f32.mrb[0].mxu0
        %v722 = vadd.f32 0.0, %v721
        %v723 = vpop.f32.mrb[0].mxu0
        %v724 = vadd.f32 0.0, %v723
        %v725 = vpop.f32.mrb[0].mxu0
        %v726 = vadd.f32 0.0, %v725
        %727 = vdwg.mxu0
        %v728 = vadd.f32 %v622, %v710
        %v729 = vadd.f32 %v624, %v712
        %v730 = vadd.f32 %v626, %v714
        %v731 = vadd.f32 %v628, %v716
        %v732 = vadd.f32 %v632, %v720
        %v733 = vadd.f32 %v634, %v722
        %v734 = vadd.f32 %v636, %v724
        %v735 = vadd.f32 %v638, %v726
        %s736 = scalar_lea.vmem %s1, 96
        %v737 = vld [vmem:[%s736] sm:$0xff]
        %v738 = vld [vmem:[%s736 + $0x8] sm:$0xff]
        %v739 = vld [vmem:[%s736 + $0x10] sm:$0xff]
        %v740 = vld [vmem:[%s736 + $0x18] sm:$0xff]
        %vm741 = vsmask.f32 6400
        %v742 = vrot.slane %v469, 1
        %v743 = vrot.slane %v471, 2
        %v744 = vor.u32 %v742, %v743
        %v745 = vrot.slane %v480, 1
        %v746 = vrot.slane %v476, 2
        %v747 = vor.u32 %v745, %v746
        %v748 = vsel %vm741, %v744, %v747
        %v753 = vunpack.c.l.b16 %v737
        %v754 = vunpack.c.h.b16 %v737
        %v755 = vunpack.c.l.b16 %v738
        %v756 = vunpack.c.h.b16 %v738
        %v757 = vunpack.c.l.b16 %v739
        %v758 = vunpack.c.h.b16 %v739
        %v759 = vunpack.c.l.b16 %v740
        %v760 = vunpack.c.h.b16 %v740
        %v761 = vpack.c.b16 %v755, %v753
        %v762 = vpack.c.b16 %v756, %v754
        %v763 = vpack.c.b16 %v759, %v757
        %v764 = vpack.c.b16 %v760, %v758
        %v770 = vsel %vm503, %v748, 0
        %v773 = vsel %vm503, %v747, 0
        %775 = vmatprep.subr.bf16.mxu0 %v762
        %776 = vmatpush1.bf16.msra.mxu0 %v761
        %777 = vmatprep.subr.bf16.mxu0 %v764
        %778 = vmatpush1.bf16.msra.mxu0 %v763
        %779 = vmatprep.subr.bf16.mxu0 0
        %780 = vmatpush1.bf16.msra.mxu0 0
        %781 = vmatprep.subr.bf16.mxu0 0
        %782 = vmatpush1.bf16.msra.mxu0 0
        %783 = vmatprep.subr.bf16.mxu0 0
        %784 = vmatpush1.bf16.msra.mxu0 0
        %785 = vmatprep.subr.bf16.mxu0 0
        %786 = vmatpush1.bf16.msra.mxu0 0
        %787 = vmatprep.subr.bf16.mxu0 0
        %788 = vmatpush1.bf16.msra.mxu0 0
        %789 = vmatprep.subr.bf16.mxu0 0
        %790 = vmatpush1.bf16.msra.mxu0 0
        %791 = vmatprep.subr.bf16.mxu0 0
        %792 = vmatpush1.bf16.msra.mxu0 0
        %793 = vmatprep.subr.bf16.mxu0 0
        %794 = vmatpush1.bf16.msra.mxu0 0
        %795 = vmatprep.subr.bf16.mxu0 0
        %796 = vmatpush1.bf16.msra.mxu0 0
        %797 = vmatprep.subr.bf16.mxu0 0
        %798 = vmatpush1.bf16.msra.mxu0 0
        %799 = vmatprep.subr.bf16.mxu0 0
        %800 = vmatpush1.bf16.msra.mxu0 0
        %801 = vmatprep.subr.bf16.mxu0 0
        %802 = vmatpush1.bf16.msra.mxu0 0
        %803 = vmatprep.subr.bf16.mxu0 0
        %804 = vmatpush1.bf16.msra.mxu0 0
        %805 = vmatprep.subr.bf16.mxu0 0
        %806 = vmatpush1.bf16.msra.mxu0 0
        %807 = vmatprep.mubr.bf16.mxu0 0
        %808 = vmatmul.mubr.bf16.gmra.mrb[0].mxu0 %v770
        %v809 = vpop.f32.mrb[0].mxu0
        %v810 = vadd.f32 0.0, %v809
        %v811 = vpop.f32.mrb[0].mxu0
        %v812 = vadd.f32 0.0, %v811
        %v813 = vpop.f32.mrb[0].mxu0
        %v814 = vadd.f32 0.0, %v813
        %v815 = vpop.f32.mrb[0].mxu0
        %v816 = vadd.f32 0.0, %v815
        %817 = vmatprep.mubr.bf16.mxu0 0
        %818 = vmatmul.mubr.bf16.gmra.mrb[0].mxu0 %v773
        %v819 = vpop.f32.mrb[0].mxu0
        %v820 = vadd.f32 0.0, %v819
        %v821 = vpop.f32.mrb[0].mxu0
        %v822 = vadd.f32 0.0, %v821
        %v823 = vpop.f32.mrb[0].mxu0
        %v824 = vadd.f32 0.0, %v823
        %v825 = vpop.f32.mrb[0].mxu0
        %v826 = vadd.f32 0.0, %v825
        %827 = vdwg.mxu0
        %v828 = vadd.f32 %v728, %v810
        %v829 = vadd.f32 %v729, %v812
        %v830 = vadd.f32 %v730, %v814
        %v831 = vadd.f32 %v731, %v816
        %v832 = vadd.f32 %v732, %v820
        %v833 = vadd.f32 %v733, %v822
        %v834 = vadd.f32 %v734, %v824
        %v835 = vadd.f32 %v735, %v826
        %s836 = scalar_lea.vmem %s1, 128
        %v837 = vld [vmem:[%s836] sm:$0xff]
        %v838 = vld [vmem:[%s836 + $0x8] sm:$0xff]
        %v839 = vld [vmem:[%s836 + $0x10] sm:$0xff]
        %v840 = vld [vmem:[%s836 + $0x18] sm:$0xff]
        %vm841 = vcmask 1045504
        %v842 = vrot.slane %v465, 2
        %v843 = vrot.slane %v466, 2
        %v844 = vsel %vm841, %v842, %v843
        %v849 = vunpack.c.l.b16 %v837
        %v850 = vunpack.c.h.b16 %v837
        %v851 = vunpack.c.l.b16 %v838
        %v852 = vunpack.c.h.b16 %v838
        %v853 = vunpack.c.l.b16 %v839
        %v854 = vunpack.c.h.b16 %v839
        %v855 = vunpack.c.l.b16 %v840
        %v856 = vunpack.c.h.b16 %v840
        %v857 = vpack.c.b16 %v851, %v849
        %v858 = vpack.c.b16 %v852, %v850
        %v859 = vpack.c.b16 %v855, %v853
        %v860 = vpack.c.b16 %v856, %v854
        %v866 = vsel %vm503, %v844, 0
        %v869 = vsel %vm503, %v843, 0
        %871 = vmatprep.subr.bf16.mxu0 %v858
        %872 = vmatpush1.bf16.msra.mxu0 %v857
        %873 = vmatprep.subr.bf16.mxu0 %v860
        %874 = vmatpush1.bf16.msra.mxu0 %v859
        %875 = vmatprep.subr.bf16.mxu0 0
        %876 = vmatpush1.bf16.msra.mxu0 0
        %877 = vmatprep.subr.bf16.mxu0 0
        %878 = vmatpush1.bf16.msra.mxu0 0
        %879 = vmatprep.subr.bf16.mxu0 0
        %880 = vmatpush1.bf16.msra.mxu0 0
        %881 = vmatprep.subr.bf16.mxu0 0
        %882 = vmatpush1.bf16.msra.mxu0 0
        %883 = vmatprep.subr.bf16.mxu0 0
        %884 = vmatpush1.bf16.msra.mxu0 0
        %885 = vmatprep.subr.bf16.mxu0 0
        %886 = vmatpush1.bf16.msra.mxu0 0
        %887 = vmatprep.subr.bf16.mxu0 0
        %888 = vmatpush1.bf16.msra.mxu0 0
        %889 = vmatprep.subr.bf16.mxu0 0
        %890 = vmatpush1.bf16.msra.mxu0 0
        %891 = vmatprep.subr.bf16.mxu0 0
        %892 = vmatpush1.bf16.msra.mxu0 0
        %893 = vmatprep.subr.bf16.mxu0 0
        %894 = vmatpush1.bf16.msra.mxu0 0
        %895 = vmatprep.subr.bf16.mxu0 0
        %896 = vmatpush1.bf16.msra.mxu0 0
        %897 = vmatprep.subr.bf16.mxu0 0
        %898 = vmatpush1.bf16.msra.mxu0 0
        %899 = vmatprep.subr.bf16.mxu0 0
        %900 = vmatpush1.bf16.msra.mxu0 0
        %901 = vmatprep.subr.bf16.mxu0 0
        %902 = vmatpush1.bf16.msra.mxu0 0
        %903 = vmatprep.mubr.bf16.mxu0 0
        %904 = vmatmul.mubr.bf16.gmra.mrb[0].mxu0 %v866
        %v905 = vpop.f32.mrb[0].mxu0
        %v906 = vadd.f32 0.0, %v905
        %v907 = vpop.f32.mrb[0].mxu0
        %v908 = vadd.f32 0.0, %v907
        %v909 = vpop.f32.mrb[0].mxu0
        %v910 = vadd.f32 0.0, %v909
        %v911 = vpop.f32.mrb[0].mxu0
        %v912 = vadd.f32 0.0, %v911
        %913 = vmatprep.mubr.bf16.mxu0 0
        %914 = vmatmul.mubr.bf16.gmra.mrb[0].mxu0 %v869
        %v915 = vpop.f32.mrb[0].mxu0
        %v916 = vadd.f32 0.0, %v915
        %v917 = vpop.f32.mrb[0].mxu0
        %v918 = vadd.f32 0.0, %v917
        %v919 = vpop.f32.mrb[0].mxu0
        %v920 = vadd.f32 0.0, %v919
        %v921 = vpop.f32.mrb[0].mxu0
        %v922 = vadd.f32 0.0, %v921
        %923 = vdwg.mxu0
        %v924 = vadd.f32 %v828, %v906
        %v925 = vadd.f32 %v829, %v908
        %v926 = vadd.f32 %v830, %v910
        %v927 = vadd.f32 %v831, %v912
        %v928 = vadd.f32 %v832, %v916
        %v929 = vadd.f32 %v833, %v918
        %v930 = vadd.f32 %v834, %v920
        %v931 = vadd.f32 %v835, %v922
        %v932 = vld [vmem:[%s2] sm:$0x3]
        %v934 = vlaneseq
        %v935 = vshrl.u32 %v934, 7
        %v936 = vsub.s32 0, %v935
        %v937 = vrot.slane %v932, %v936
        %v938 = vlaneseq
        %v939 = vshrl.u32 %v938, 7
        %v940 = vsub.s32 1, %v939
        %v941 = vrot.slane %v932, %v940
        %v944 = vadd.f32 %v924, %v937
        %v945 = vadd.f32 %v925, %v941
        %v946 = vadd.f32 %v926, %v937
        %v947 = vadd.f32 %v927, %v941
        %v948 = vadd.f32 %v928, %v937
        %v949 = vadd.f32 %v929, %v941
        %v950 = vadd.f32 %v930, %v937
        %v951 = vadd.f32 %v931, %v941
        %v952 = vmax.f32 %v944, 0.0
        %v953 = vmax.f32 %v945, 0.0
        %v954 = vmax.f32 %v946, 0.0
        %v955 = vmax.f32 %v947, 0.0
        %v956 = vmax.f32 %v948, 0.0
        %v957 = vmax.f32 %v949, 0.0
        %v958 = vmax.f32 %v950, 0.0
        %v959 = vmax.f32 %v951, 0.0
        %v960 = vmax.f32 %v952, %v953
        %v961 = vmax.f32 %v954, %v955
        %v962 = vmax.f32 %v956, %v957
        %v963 = vmax.f32 %v958, %v959
        %v968 = vcombine.high %v960, %v960
        %v970 = vunpack.c.l.s4 1983009808
        %v971 = vunpack.c.0.s8 %v970
        %v972 = vlaneseq
        %v973 = vshrl.u32 %v972, 7
        %v974 = vsub.s32 %v971, %v973
        %v975 = vrot.slane %v960, %v974
        %v977 = vunpack.c.l.s4 1983009808
        %v978 = vunpack.c.0.s8 %v977
        %v979 = vlaneseq
        %v980 = vshrl.u32 %v979, 7
        %v981 = vsub.s32 %v978, %v980
        %v982 = vrot.slane %v968, %v981
        %v983 = vcombine.high %v975, %v975
        %v984 = vcombine.high %v982, %v982
        %v985 = vcombine.high %v961, %v961
        %v987 = vunpack.c.l.s4 1983009808
        %v988 = vunpack.c.0.s8 %v987
        %v989 = vlaneseq
        %v990 = vshrl.u32 %v989, 7
        %v991 = vsub.s32 %v988, %v990
        %v992 = vrot.slane %v961, %v991
        %v994 = vunpack.c.l.s4 1983009808
        %v995 = vunpack.c.0.s8 %v994
        %v996 = vlaneseq
        %v997 = vshrl.u32 %v996, 7
        %v998 = vsub.s32 %v995, %v997
        %v999 = vrot.slane %v985, %v998
        %v1000 = vcombine.high %v992, %v992
        %v1001 = vcombine.high %v999, %v999
        %v1002 = vcombine.high %v962, %v962
        %v1004 = vunpack.c.l.s4 1983009808
        %v1005 = vunpack.c.0.s8 %v1004
        %v1006 = vlaneseq
        %v1007 = vshrl.u32 %v1006, 7
        %v1008 = vsub.s32 %v1005, %v1007
        %v1009 = vrot.slane %v962, %v1008
        %v1011 = vunpack.c.l.s4 1983009808
        %v1012 = vunpack.c.0.s8 %v1011
        %v1013 = vlaneseq
        %v1014 = vshrl.u32 %v1013, 7
        %v1015 = vsub.s32 %v1012, %v1014
        %v1016 = vrot.slane %v1002, %v1015
        %v1017 = vcombine.high %v1009, %v1009
        %v1018 = vcombine.high %v1016, %v1016
        %v1020 = vunpack.c.l.s4 1983009808
        %v1021 = vunpack.c.0.s8 %v1020
        %v1022 = vlaneseq
        %v1023 = vshrl.u32 %v1022, 7
        %v1024 = vsub.s32 %v1021, %v1023
        %v1025 = vrot.slane %v963, %v1024
        %v1026 = vcombine.high %v1025, %v1025
        %v1041 = vrot.slane %v975, 7
        %v1042 = vrot.slane %v1041, 2
        %v1043 = vrot.slane %v983, 7
        %v1044 = vrot.slane %v1043, 2
        %v1045 = vrot.slane %v982, 7
        %v1046 = vrot.slane %v1045, 2
        %v1047 = vrot.slane %v984, 7
        %v1048 = vrot.slane %v1047, 2
        %v1049 = vrot.slane %v992, 7
        %v1050 = vrot.slane %v1049, 2
        %v1051 = vrot.slane %v1000, 7
        %v1052 = vrot.slane %v1051, 2
        %v1053 = vrot.slane %v999, 7
        %v1054 = vrot.slane %v1053, 2
        %v1055 = vrot.slane %v1001, 7
        %v1056 = vrot.slane %v1055, 2
        %v1057 = vrot.slane %v1009, 7
        %v1058 = vrot.slane %v1057, 2
        %v1059 = vrot.slane %v1017, 7
        %v1060 = vrot.slane %v1059, 2
        %v1061 = vrot.slane %v1016, 7
        %v1062 = vrot.slane %v1061, 2
        %v1063 = vrot.slane %v1018, 7
        %v1064 = vrot.slane %v1063, 2
        %v1065 = vrot.slane %v1025, 7
        %v1066 = vrot.slane %v1065, 2
        %v1067 = vrot.slane %v1026, 7
        %v1068 = vrot.slane %v1067, 2
        %v1083 = vmax.f32 %v975, %v1042
        %v1084 = vmax.f32 %v983, %v1044
        %v1085 = vmax.f32 %v982, %v1046
        %v1086 = vmax.f32 %v984, %v1048
        %v1087 = vmax.f32 %v992, %v1050
        %v1088 = vmax.f32 %v1000, %v1052
        %v1089 = vmax.f32 %v999, %v1054
        %v1090 = vmax.f32 %v1001, %v1056
        %v1091 = vmax.f32 %v1009, %v1058
        %v1092 = vmax.f32 %v1017, %v1060
        %v1093 = vmax.f32 %v1016, %v1062
        %v1094 = vmax.f32 %v1018, %v1064
        %v1095 = vmax.f32 %v1025, %v1066
        %v1096 = vmax.f32 %v1026, %v1068
        %v1097 = vpack.c.bf16 %v1083, %v1083
        %v1098 = vpack.c.bf16 %v1084, %v1084
        %v1099 = vpack.c.bf16 %v1085, %v1085
        %v1100 = vpack.c.bf16 %v1086, %v1086
        %v1101 = vpack.c.bf16 %v1087, %v1087
        %v1102 = vpack.c.bf16 %v1088, %v1088
        %v1103 = vpack.c.bf16 %v1089, %v1089
        %v1104 = vpack.c.bf16 %v1090, %v1090
        %v1105 = vpack.c.bf16 %v1091, %v1091
        %v1106 = vpack.c.bf16 %v1092, %v1092
        %v1107 = vpack.c.bf16 %v1093, %v1093
        %v1108 = vpack.c.bf16 %v1094, %v1094
        %v1109 = vpack.c.bf16 %v1095, %v1095
        %v1110 = vpack.c.bf16 %v1096, %v1096
        %v1111 = vld [vmem:[#allocation2] sm:$0xff]
        %v1112 = vld [vmem:[#allocation2 + $0x8] sm:$0xff]
        %v1113 = vld [vmem:[#allocation2 + $0x10] sm:$0xff]
        %v1114 = vld [vmem:[#allocation2 + $0x18] sm:$0xff]
        %v1115 = vld [vmem:[#allocation2 + $0x20] sm:$0xff]
        %v1116 = vld [vmem:[#allocation2 + $0x28] sm:$0xff]
        %v1117 = vld [vmem:[#allocation2 + $0x30] sm:$0xff]
        %v1118 = vld [vmem:[#allocation2 + $0x38] sm:$0xff]
        %v1119 = vld [vmem:[#allocation2 + $0x40] sm:$0xff]
        %v1120 = vld [vmem:[#allocation2 + $0x48] sm:$0xff]
        %v1121 = vld [vmem:[#allocation2 + $0x50] sm:$0xff]
        %v1122 = vld [vmem:[#allocation2 + $0x58] sm:$0xff]
        %v1123 = vld [vmem:[#allocation2 + $0x60] sm:$0xff]
        %v1124 = vld [vmem:[#allocation2 + $0x68] sm:$0xff]
        %v1125 = vld [vmem:[#allocation2 + $0x70] sm:$0xff]
        %v1126 = vld [vmem:[#allocation2 + $0x78] sm:$0xff]
        %s1127 = scalar_lea.vmem [#allocation2], 128
        %v1128 = vld [vmem:[%s1127] sm:$0xff]
        %v1129 = vld [vmem:[%s1127 + $0x8] sm:$0xff]
        %v1130 = vld [vmem:[%s1127 + $0x10] sm:$0xff]
        %v1131 = vld [vmem:[%s1127 + $0x18] sm:$0xff]
        %v1132 = vld [vmem:[%s1127 + $0x20] sm:$0xff]
        %v1133 = vld [vmem:[%s1127 + $0x28] sm:$0xff]
        %v1134 = vld [vmem:[%s1127 + $0x30] sm:$0xff]
        %v1135 = vld [vmem:[%s1127 + $0x38] sm:$0xff]
        %v1136 = vld [vmem:[%s1127 + $0x40] sm:$0xff]
        %v1137 = vld [vmem:[%s1127 + $0x48] sm:$0xff]
        %v1138 = vld [vmem:[%s1127 + $0x50] sm:$0xff]
        %v1139 = vld [vmem:[%s1127 + $0x58] sm:$0xff]
        %v1140 = vld [vmem:[%s1127 + $0x60] sm:$0xff]
        %v1141 = vld [vmem:[%s1127 + $0x68] sm:$0xff]
        %v1142 = vld [vmem:[%s1127 + $0x70] sm:$0xff]
        %v1143 = vld [vmem:[%s1127 + $0x78] sm:$0xff]
        %v1154 = vunpack.c.l.b16 %v1098
        %v1155 = vunpack.c.l.b16 %v1099
        %v1156 = vunpack.c.l.b16 %v1100
        %v1157 = vunpack.c.l.b16 %v1101
        %v1158 = vunpack.c.l.b16 %v1102
        %v1159 = vunpack.c.l.b16 %v1103
        %v1160 = vunpack.c.l.b16 %v1104
        %v1161 = vunpack.c.l.b16 %v1105
        %v1162 = vunpack.c.l.b16 %v1106
        %v1163 = vunpack.c.l.b16 %v1107
        %v1164 = vrot.slane %v1155, 7
        %vm1165 = vcmask 1041409
        %v1166 = vsel %vm1165, %v1164, %v1154
        %v1167 = vrot.slane %v1156, 6
        %vm1168 = vcmask 1042434
        %v1169 = vsel %vm1168, %v1167, %v1166
        %v1170 = vrot.slane %v1157, 5
        %vm1171 = vcmask 1043459
        %v1172 = vsel %vm1171, %v1170, %v1169
        %v1173 = vrot.slane %v1158, 4
        %vm1174 = vcmask 1044484
        %v1175 = vsel %vm1174, %v1173, %v1172
        %v1176 = vrot.slane %v1159, 3
        %vm1177 = vcmask 1045509
        %v1178 = vsel %vm1177, %v1176, %v1175
        %v1179 = vrot.slane %v1160, 2
        %vm1180 = vcmask 1046534
        %v1181 = vsel %vm1180, %v1179, %v1178
        %v1182 = vrot.slane %v1161, 1
        %vm1183 = vcmask 1047559
        %v1184 = vsel %vm1183, %v1182, %v1181
        %v1185 = vrot.slane %v1163, 7
        %v1186 = vsel %vm1165, %v1185, %v1162
        %v1187 = vpack.c.b16 %v1186, %v1184
        %v1205 = vunpack.c.l.b16 %v1128
        %v1206 = vunpack.c.h.b16 %v1128
        %v1207 = vunpack.c.l.b16 %v1129
        %v1208 = vunpack.c.h.b16 %v1129
        %v1209 = vunpack.c.l.b16 %v1130
        %v1210 = vunpack.c.h.b16 %v1130
        %v1211 = vunpack.c.l.b16 %v1131
        %v1212 = vunpack.c.h.b16 %v1131
        %v1213 = vunpack.c.l.b16 %v1132
        %v1214 = vunpack.c.h.b16 %v1132
        %v1215 = vunpack.c.l.b16 %v1133
        %v1216 = vunpack.c.h.b16 %v1133
        %v1217 = vunpack.c.l.b16 %v1134
        %v1218 = vunpack.c.h.b16 %v1134
        %v1219 = vunpack.c.l.b16 %v1135
        %v1220 = vunpack.c.h.b16 %v1135
        %v1221 = vunpack.c.l.b16 %v1136
        %v1222 = vunpack.c.h.b16 %v1136
        %v1223 = vunpack.c.l.b16 %v1137
        %v1224 = vunpack.c.h.b16 %v1137
        %v1225 = vunpack.c.l.b16 %v1138
        %v1226 = vunpack.c.h.b16 %v1138
        %v1227 = vunpack.c.l.b16 %v1139
        %v1228 = vunpack.c.h.b16 %v1139
        %v1229 = vunpack.c.l.b16 %v1140
        %v1230 = vunpack.c.h.b16 %v1140
        %v1231 = vunpack.c.l.b16 %v1141
        %v1232 = vunpack.c.h.b16 %v1141
        %v1233 = vunpack.c.l.b16 %v1142
        %v1234 = vunpack.c.h.b16 %v1142
        %v1235 = vunpack.c.l.b16 %v1143
        %v1236 = vunpack.c.h.b16 %v1143
        %v1237 = vpack.c.b16 %v1207, %v1205
        %v1238 = vpack.c.b16 %v1208, %v1206
        %v1239 = vpack.c.b16 %v1211, %v1209
        %v1240 = vpack.c.b16 %v1212, %v1210
        %v1241 = vpack.c.b16 %v1215, %v1213
        %v1242 = vpack.c.b16 %v1216, %v1214
        %v1243 = vpack.c.b16 %v1219, %v1217
        %v1244 = vpack.c.b16 %v1220, %v1218
        %v1245 = vpack.c.b16 %v1223, %v1221
        %v1246 = vpack.c.b16 %v1224, %v1222
        %v1247 = vpack.c.b16 %v1227, %v1225
        %v1248 = vpack.c.b16 %v1228, %v1226
        %v1249 = vpack.c.b16 %v1231, %v1229
        %v1250 = vpack.c.b16 %v1232, %v1230
        %v1251 = vpack.c.b16 %v1235, %v1233
        %v1252 = vpack.c.b16 %v1236, %v1234
        %1269 = vmatprep.subr.bf16.mxu0 %v1238
        %1270 = vmatpush1.bf16.msra.mxu0 %v1237
        %1271 = vmatprep.subr.bf16.mxu0 %v1240
        %1272 = vmatpush1.bf16.msra.mxu0 %v1239
        %1273 = vmatprep.subr.bf16.mxu0 %v1242
        %1274 = vmatpush1.bf16.msra.mxu0 %v1241
        %1275 = vmatprep.subr.bf16.mxu0 %v1244
        %1276 = vmatpush1.bf16.msra.mxu0 %v1243
        %1277 = vmatprep.subr.bf16.mxu0 %v1246
        %1278 = vmatpush1.bf16.msra.mxu0 %v1245
        %1279 = vmatprep.subr.bf16.mxu0 %v1248
        %1280 = vmatpush1.bf16.msra.mxu0 %v1247
        %1281 = vmatprep.subr.bf16.mxu0 %v1250
        %1282 = vmatpush1.bf16.msra.mxu0 %v1249
        %1283 = vmatprep.subr.bf16.mxu0 %v1252
        %1284 = vmatpush1.bf16.msra.mxu0 %v1251
        %1285 = vmatprep.subr.bf16.mxu0 0
        %1286 = vmatpush1.bf16.msra.mxu0 0
        %1287 = vmatprep.subr.bf16.mxu0 0
        %1288 = vmatpush1.bf16.msra.mxu0 0
        %1289 = vmatprep.subr.bf16.mxu0 0
        %1290 = vmatpush1.bf16.msra.mxu0 0
        %1291 = vmatprep.subr.bf16.mxu0 0
        %1292 = vmatpush1.bf16.msra.mxu0 0
        %1293 = vmatprep.subr.bf16.mxu0 0
        %1294 = vmatpush1.bf16.msra.mxu0 0
        %1295 = vmatprep.subr.bf16.mxu0 0
        %1296 = vmatpush1.bf16.msra.mxu0 0
        %1297 = vmatprep.subr.bf16.mxu0 0
        %1298 = vmatpush1.bf16.msra.mxu0 0
        %1299 = vmatprep.subr.bf16.mxu0 0
        %1300 = vmatpush1.bf16.msra.mxu0 0
        %1301 = vmatprep.mubr.bf16.mxu0 0
        %1302 = vmatmul.mubr.bf16.gmra.mrb[0].mxu0 %v1187
        %v1303 = vpop.f32.mrb[0].mxu0
        %v1304 = vadd.f32 0.0, %v1303
        %v1305 = vpop.f32.mrb[0].mxu0
        %v1306 = vadd.f32 0.0, %v1305
        %v1307 = vpop.f32.mrb[0].mxu0
        %v1308 = vadd.f32 0.0, %v1307
        %v1309 = vpop.f32.mrb[0].mxu0
        %v1310 = vadd.f32 0.0, %v1309
        %1311 = vdwg.mxu0
        %v1313 = vunpack.c.l.b16 %v1097
        %v1314 = vrot.slane %v1154, 7
        %v1315 = vsel %vm1165, %v1314, %v1313
        %v1316 = vrot.slane %v1155, 6
        %v1317 = vsel %vm1168, %v1316, %v1315
        %v1318 = vrot.slane %v1156, 5
        %v1319 = vsel %vm1171, %v1318, %v1317
        %v1320 = vrot.slane %v1157, 4
        %v1321 = vsel %vm1174, %v1320, %v1319
        %v1322 = vrot.slane %v1158, 3
        %v1323 = vsel %vm1177, %v1322, %v1321
        %v1324 = vrot.slane %v1159, 2
        %v1325 = vsel %vm1180, %v1324, %v1323
        %v1326 = vrot.slane %v1160, 1
        %v1327 = vsel %vm1183, %v1326, %v1325
        %v1328 = vrot.slane %v1162, 7
        %v1329 = vsel %vm1165, %v1328, %v1161
        %v1330 = vpack.c.b16 %v1329, %v1327
        %v1348 = vunpack.c.l.b16 %v1111
        %v1349 = vunpack.c.h.b16 %v1111
        %v1350 = vunpack.c.l.b16 %v1112
        %v1351 = vunpack.c.h.b16 %v1112
        %v1352 = vunpack.c.l.b16 %v1113
        %v1353 = vunpack.c.h.b16 %v1113
        %v1354 = vunpack.c.l.b16 %v1114
        %v1355 = vunpack.c.h.b16 %v1114
        %v1356 = vunpack.c.l.b16 %v1115
        %v1357 = vunpack.c.h.b16 %v1115
        %v1358 = vunpack.c.l.b16 %v1116
        %v1359 = vunpack.c.h.b16 %v1116
        %v1360 = vunpack.c.l.b16 %v1117
        %v1361 = vunpack.c.h.b16 %v1117
        %v1362 = vunpack.c.l.b16 %v1118
        %v1363 = vunpack.c.h.b16 %v1118
        %v1364 = vunpack.c.l.b16 %v1119
        %v1365 = vunpack.c.h.b16 %v1119
        %v1366 = vunpack.c.l.b16 %v1120
        %v1367 = vunpack.c.h.b16 %v1120
        %v1368 = vunpack.c.l.b16 %v1121
        %v1369 = vunpack.c.h.b16 %v1121
        %v1370 = vunpack.c.l.b16 %v1122
        %v1371 = vunpack.c.h.b16 %v1122
        %v1372 = vunpack.c.l.b16 %v1123
        %v1373 = vunpack.c.h.b16 %v1123
        %v1374 = vunpack.c.l.b16 %v1124
        %v1375 = vunpack.c.h.b16 %v1124
        %v1376 = vunpack.c.l.b16 %v1125
        %v1377 = vunpack.c.h.b16 %v1125
        %v1378 = vunpack.c.l.b16 %v1126
        %v1379 = vunpack.c.h.b16 %v1126
        %v1380 = vpack.c.b16 %v1350, %v1348
        %v1381 = vpack.c.b16 %v1351, %v1349
        %v1382 = vpack.c.b16 %v1354, %v1352
        %v1383 = vpack.c.b16 %v1355, %v1353
        %v1384 = vpack.c.b16 %v1358, %v1356
        %v1385 = vpack.c.b16 %v1359, %v1357
        %v1386 = vpack.c.b16 %v1362, %v1360
        %v1387 = vpack.c.b16 %v1363, %v1361
        %v1388 = vpack.c.b16 %v1366, %v1364
        %v1389 = vpack.c.b16 %v1367, %v1365
        %v1390 = vpack.c.b16 %v1370, %v1368
        %v1391 = vpack.c.b16 %v1371, %v1369
        %v1392 = vpack.c.b16 %v1374, %v1372
        %v1393 = vpack.c.b16 %v1375, %v1373
        %v1394 = vpack.c.b16 %v1378, %v1376
        %v1395 = vpack.c.b16 %v1379, %v1377
        %1412 = vmatprep.subr.bf16.mxu0 %v1381
        %1413 = vmatpush1.bf16.msra.mxu0 %v1380
        %1414 = vmatprep.subr.bf16.mxu0 %v1383
        %1415 = vmatpush1.bf16.msra.mxu0 %v1382
        %1416 = vmatprep.subr.bf16.mxu0 %v1385
        %1417 = vmatpush1.bf16.msra.mxu0 %v1384
        %1418 = vmatprep.subr.bf16.mxu0 %v1387
        %1419 = vmatpush1.bf16.msra.mxu0 %v1386
        %1420 = vmatprep.subr.bf16.mxu0 %v1389
        %1421 = vmatpush1.bf16.msra.mxu0 %v1388
        %1422 = vmatprep.subr.bf16.mxu0 %v1391
        %1423 = vmatpush1.bf16.msra.mxu0 %v1390
        %1424 = vmatprep.subr.bf16.mxu0 %v1393
        %1425 = vmatpush1.bf16.msra.mxu0 %v1392
        %1426 = vmatprep.subr.bf16.mxu0 %v1395
        %1427 = vmatpush1.bf16.msra.mxu0 %v1394
        %1428 = vmatprep.subr.bf16.mxu0 0
        %1429 = vmatpush1.bf16.msra.mxu0 0
        %1430 = vmatprep.subr.bf16.mxu0 0
        %1431 = vmatpush1.bf16.msra.mxu0 0
        %1432 = vmatprep.subr.bf16.mxu0 0
        %1433 = vmatpush1.bf16.msra.mxu0 0
        %1434 = vmatprep.subr.bf16.mxu0 0
        %1435 = vmatpush1.bf16.msra.mxu0 0
        %1436 = vmatprep.subr.bf16.mxu0 0
        %1437 = vmatpush1.bf16.msra.mxu0 0
        %1438 = vmatprep.subr.bf16.mxu0 0
        %1439 = vmatpush1.bf16.msra.mxu0 0
        %1440 = vmatprep.subr.bf16.mxu0 0
        %1441 = vmatpush1.bf16.msra.mxu0 0
        %1442 = vmatprep.subr.bf16.mxu0 0
        %1443 = vmatpush1.bf16.msra.mxu0 0
        %1444 = vmatprep.mubr.bf16.mxu0 0
        %1445 = vmatmul.mubr.bf16.gmra.mrb[0].mxu0 %v1330
        %v1446 = vpop.f32.mrb[0].mxu0
        %v1447 = vadd.f32 %v1304, %v1446
        %v1448 = vpop.f32.mrb[0].mxu0
        %v1449 = vadd.f32 %v1306, %v1448
        %v1450 = vpop.f32.mrb[0].mxu0
        %v1451 = vadd.f32 %v1308, %v1450
        %v1452 = vpop.f32.mrb[0].mxu0
        %v1453 = vadd.f32 %v1310, %v1452
        %1454 = vdwg.mxu0
        %s1455 = scalar_lea.vmem [#allocation2], 256
        %v1456 = vld [vmem:[%s1455] sm:$0xff]
        %v1457 = vld [vmem:[%s1455 + $0x8] sm:$0xff]
        %v1458 = vld [vmem:[%s1455 + $0x10] sm:$0xff]
        %v1459 = vld [vmem:[%s1455 + $0x18] sm:$0xff]
        %v1460 = vld [vmem:[%s1455 + $0x20] sm:$0xff]
        %v1461 = vld [vmem:[%s1455 + $0x28] sm:$0xff]
        %v1462 = vld [vmem:[%s1455 + $0x30] sm:$0xff]
        %v1463 = vld [vmem:[%s1455 + $0x38] sm:$0xff]
        %v1464 = vld [vmem:[%s1455 + $0x40] sm:$0xff]
        %v1465 = vld [vmem:[%s1455 + $0x48] sm:$0xff]
        %v1466 = vld [vmem:[%s1455 + $0x50] sm:$0xff]
        %v1467 = vld [vmem:[%s1455 + $0x58] sm:$0xff]
        %v1468 = vld [vmem:[%s1455 + $0x60] sm:$0xff]
        %v1469 = vld [vmem:[%s1455 + $0x68] sm:$0xff]
        %v1470 = vld [vmem:[%s1455 + $0x70] sm:$0xff]
        %v1471 = vld [vmem:[%s1455 + $0x78] sm:$0xff]
        %v1473 = vunpack.c.l.b16 %v1108
        %v1474 = vrot.slane %v1156, 7
        %v1475 = vsel %vm1165, %v1474, %v1155
        %v1476 = vrot.slane %v1157, 6
        %v1477 = vsel %vm1168, %v1476, %v1475
        %v1478 = vrot.slane %v1158, 5
        %v1479 = vsel %vm1171, %v1478, %v1477
        %v1480 = vrot.slane %v1159, 4
        %v1481 = vsel %vm1174, %v1480, %v1479
        %v1482 = vrot.slane %v1160, 3
        %v1483 = vsel %vm1177, %v1482, %v1481
        %v1484 = vrot.slane %v1161, 2
        %v1485 = vsel %vm1180, %v1484, %v1483
        %v1486 = vrot.slane %v1162, 1
        %v1487 = vsel %vm1183, %v1486, %v1485
        %v1488 = vrot.slane %v1473, 7
        %v1489 = vsel %vm1165, %v1488, %v1163
        %v1490 = vpack.c.b16 %v1489, %v1487
        %v1508 = vunpack.c.l.b16 %v1456
        %v1509 = vunpack.c.h.b16 %v1456
        %v1510 = vunpack.c.l.b16 %v1457
        %v1511 = vunpack.c.h.b16 %v1457
        %v1512 = vunpack.c.l.b16 %v1458
        %v1513 = vunpack.c.h.b16 %v1458
        %v1514 = vunpack.c.l.b16 %v1459
        %v1515 = vunpack.c.h.b16 %v1459
        %v1516 = vunpack.c.l.b16 %v1460
        %v1517 = vunpack.c.h.b16 %v1460
        %v1518 = vunpack.c.l.b16 %v1461
        %v1519 = vunpack.c.h.b16 %v1461
        %v1520 = vunpack.c.l.b16 %v1462
        %v1521 = vunpack.c.h.b16 %v1462
        %v1522 = vunpack.c.l.b16 %v1463
        %v1523 = vunpack.c.h.b16 %v1463
        %v1524 = vunpack.c.l.b16 %v1464
        %v1525 = vunpack.c.h.b16 %v1464
        %v1526 = vunpack.c.l.b16 %v1465
        %v1527 = vunpack.c.h.b16 %v1465
        %v1528 = vunpack.c.l.b16 %v1466
        %v1529 = vunpack.c.h.b16 %v1466
        %v1530 = vunpack.c.l.b16 %v1467
        %v1531 = vunpack.c.h.b16 %v1467
        %v1532 = vunpack.c.l.b16 %v1468
        %v1533 = vunpack.c.h.b16 %v1468
        %v1534 = vunpack.c.l.b16 %v1469
        %v1535 = vunpack.c.h.b16 %v1469
        %v1536 = vunpack.c.l.b16 %v1470
        %v1537 = vunpack.c.h.b16 %v1470
        %v1538 = vunpack.c.l.b16 %v1471
        %v1539 = vunpack.c.h.b16 %v1471
        %v1540 = vpack.c.b16 %v1510, %v1508
        %v1541 = vpack.c.b16 %v1511, %v1509
        %v1542 = vpack.c.b16 %v1514, %v1512
        %v1543 = vpack.c.b16 %v1515, %v1513
        %v1544 = vpack.c.b16 %v1518, %v1516
        %v1545 = vpack.c.b16 %v1519, %v1517
        %v1546 = vpack.c.b16 %v1522, %v1520
        %v1547 = vpack.c.b16 %v1523, %v1521
        %v1548 = vpack.c.b16 %v1526, %v1524
        %v1549 = vpack.c.b16 %v1527, %v1525
        %v1550 = vpack.c.b16 %v1530, %v1528
        %v1551 = vpack.c.b16 %v1531, %v1529
        %v1552 = vpack.c.b16 %v1534, %v1532
        %v1553 = vpack.c.b16 %v1535, %v1533
        %v1554 = vpack.c.b16 %v1538, %v1536
        %v1555 = vpack.c.b16 %v1539, %v1537
        %1572 = vmatprep.subr.bf16.mxu0 %v1541
        %1573 = vmatpush1.bf16.msra.mxu0 %v1540
        %1574 = vmatprep.subr.bf16.mxu0 %v1543
        %1575 = vmatpush1.bf16.msra.mxu0 %v1542
        %1576 = vmatprep.subr.bf16.mxu0 %v1545
        %1577 = vmatpush1.bf16.msra.mxu0 %v1544
        %1578 = vmatprep.subr.bf16.mxu0 %v1547
        %1579 = vmatpush1.bf16.msra.mxu0 %v1546
        %1580 = vmatprep.subr.bf16.mxu0 %v1549
        %1581 = vmatpush1.bf16.msra.mxu0 %v1548
        %1582 = vmatprep.subr.bf16.mxu0 %v1551
        %1583 = vmatpush1.bf16.msra.mxu0 %v1550
        %1584 = vmatprep.subr.bf16.mxu0 %v1553
        %1585 = vmatpush1.bf16.msra.mxu0 %v1552
        %1586 = vmatprep.subr.bf16.mxu0 %v1555
        %1587 = vmatpush1.bf16.msra.mxu0 %v1554
        %1588 = vmatprep.subr.bf16.mxu0 0
        %1589 = vmatpush1.bf16.msra.mxu0 0
        %1590 = vmatprep.subr.bf16.mxu0 0
        %1591 = vmatpush1.bf16.msra.mxu0 0
        %1592 = vmatprep.subr.bf16.mxu0 0
        %1593 = vmatpush1.bf16.msra.mxu0 0
        %1594 = vmatprep.subr.bf16.mxu0 0
        %1595 = vmatpush1.bf16.msra.mxu0 0
        %1596 = vmatprep.subr.bf16.mxu0 0
        %1597 = vmatpush1.bf16.msra.mxu0 0
        %1598 = vmatprep.subr.bf16.mxu0 0
        %1599 = vmatpush1.bf16.msra.mxu0 0
        %1600 = vmatprep.subr.bf16.mxu0 0
        %1601 = vmatpush1.bf16.msra.mxu0 0
        %1602 = vmatprep.subr.bf16.mxu0 0
        %1603 = vmatpush1.bf16.msra.mxu0 0
        %1604 = vmatprep.mubr.bf16.mxu0 0
        %1605 = vmatmul.mubr.bf16.gmra.mrb[0].mxu0 %v1490
        %v1606 = vpop.f32.mrb[0].mxu0
        %v1607 = vadd.f32 0.0, %v1606
        %v1608 = vpop.f32.mrb[0].mxu0
        %v1609 = vadd.f32 0.0, %v1608
        %v1610 = vpop.f32.mrb[0].mxu0
        %v1611 = vadd.f32 0.0, %v1610
        %v1612 = vpop.f32.mrb[0].mxu0
        %v1613 = vadd.f32 0.0, %v1612
        %1614 = vdwg.mxu0
        %v1615 = vadd.f32 %v1447, %v1607
        %v1616 = vadd.f32 %v1449, %v1609
        %v1617 = vadd.f32 %v1451, %v1611
        %v1618 = vadd.f32 %v1453, %v1613
        %s1619 = scalar_lea.vmem [#allocation2], 384
        %v1620 = vld [vmem:[%s1619] sm:$0xff]
        %v1621 = vld [vmem:[%s1619 + $0x8] sm:$0xff]
        %v1622 = vld [vmem:[%s1619 + $0x10] sm:$0xff]
        %v1623 = vld [vmem:[%s1619 + $0x18] sm:$0xff]
        %v1624 = vld [vmem:[%s1619 + $0x20] sm:$0xff]
        %v1625 = vld [vmem:[%s1619 + $0x28] sm:$0xff]
        %v1626 = vld [vmem:[%s1619 + $0x30] sm:$0xff]
        %v1627 = vld [vmem:[%s1619 + $0x38] sm:$0xff]
        %v1628 = vld [vmem:[%s1619 + $0x40] sm:$0xff]
        %v1629 = vld [vmem:[%s1619 + $0x48] sm:$0xff]
        %v1630 = vld [vmem:[%s1619 + $0x50] sm:$0xff]
        %v1631 = vld [vmem:[%s1619 + $0x58] sm:$0xff]
        %v1632 = vld [vmem:[%s1619 + $0x60] sm:$0xff]
        %v1633 = vld [vmem:[%s1619 + $0x68] sm:$0xff]
        %v1634 = vld [vmem:[%s1619 + $0x70] sm:$0xff]
        %v1635 = vld [vmem:[%s1619 + $0x78] sm:$0xff]
        %v1637 = vunpack.c.l.b16 %v1109
        %v1638 = vrot.slane %v1157, 7
        %v1639 = vsel %vm1165, %v1638, %v1156
        %v1640 = vrot.slane %v1158, 6
        %v1641 = vsel %vm1168, %v1640, %v1639
        %v1642 = vrot.slane %v1159, 5
        %v1643 = vsel %vm1171, %v1642, %v1641
        %v1644 = vrot.slane %v1160, 4
        %v1645 = vsel %vm1174, %v1644, %v1643
        %v1646 = vrot.slane %v1161, 3
        %v1647 = vsel %vm1177, %v1646, %v1645
        %v1648 = vrot.slane %v1162, 2
        %v1649 = vsel %vm1180, %v1648, %v1647
        %v1650 = vrot.slane %v1163, 1
        %v1651 = vsel %vm1183, %v1650, %v1649
        %v1652 = vrot.slane %v1637, 7
        %v1653 = vsel %vm1165, %v1652, %v1473
        %v1654 = vpack.c.b16 %v1653, %v1651
        %v1672 = vunpack.c.l.b16 %v1620
        %v1673 = vunpack.c.h.b16 %v1620
        %v1674 = vunpack.c.l.b16 %v1621
        %v1675 = vunpack.c.h.b16 %v1621
        %v1676 = vunpack.c.l.b16 %v1622
        %v1677 = vunpack.c.h.b16 %v1622
        %v1678 = vunpack.c.l.b16 %v1623
        %v1679 = vunpack.c.h.b16 %v1623
        %v1680 = vunpack.c.l.b16 %v1624
        %v1681 = vunpack.c.h.b16 %v1624
        %v1682 = vunpack.c.l.b16 %v1625
        %v1683 = vunpack.c.h.b16 %v1625
        %v1684 = vunpack.c.l.b16 %v1626
        %v1685 = vunpack.c.h.b16 %v1626
        %v1686 = vunpack.c.l.b16 %v1627
        %v1687 = vunpack.c.h.b16 %v1627
        %v1688 = vunpack.c.l.b16 %v1628
        %v1689 = vunpack.c.h.b16 %v1628
        %v1690 = vunpack.c.l.b16 %v1629
        %v1691 = vunpack.c.h.b16 %v1629
        %v1692 = vunpack.c.l.b16 %v1630
        %v1693 = vunpack.c.h.b16 %v1630
        %v1694 = vunpack.c.l.b16 %v1631
        %v1695 = vunpack.c.h.b16 %v1631
        %v1696 = vunpack.c.l.b16 %v1632
        %v1697 = vunpack.c.h.b16 %v1632
        %v1698 = vunpack.c.l.b16 %v1633
        %v1699 = vunpack.c.h.b16 %v1633
        %v1700 = vunpack.c.l.b16 %v1634
        %v1701 = vunpack.c.h.b16 %v1634
        %v1702 = vunpack.c.l.b16 %v1635
        %v1703 = vunpack.c.h.b16 %v1635
        %v1704 = vpack.c.b16 %v1674, %v1672
        %v1705 = vpack.c.b16 %v1675, %v1673
        %v1706 = vpack.c.b16 %v1678, %v1676
        %v1707 = vpack.c.b16 %v1679, %v1677
        %v1708 = vpack.c.b16 %v1682, %v1680
        %v1709 = vpack.c.b16 %v1683, %v1681
        %v1710 = vpack.c.b16 %v1686, %v1684
        %v1711 = vpack.c.b16 %v1687, %v1685
        %v1712 = vpack.c.b16 %v1690, %v1688
        %v1713 = vpack.c.b16 %v1691, %v1689
        %v1714 = vpack.c.b16 %v1694, %v1692
        %v1715 = vpack.c.b16 %v1695, %v1693
        %v1716 = vpack.c.b16 %v1698, %v1696
        %v1717 = vpack.c.b16 %v1699, %v1697
        %v1718 = vpack.c.b16 %v1702, %v1700
        %v1719 = vpack.c.b16 %v1703, %v1701
        %1736 = vmatprep.subr.bf16.mxu0 %v1705
        %1737 = vmatpush1.bf16.msra.mxu0 %v1704
        %1738 = vmatprep.subr.bf16.mxu0 %v1707
        %1739 = vmatpush1.bf16.msra.mxu0 %v1706
        %1740 = vmatprep.subr.bf16.mxu0 %v1709
        %1741 = vmatpush1.bf16.msra.mxu0 %v1708
        %1742 = vmatprep.subr.bf16.mxu0 %v1711
        %1743 = vmatpush1.bf16.msra.mxu0 %v1710
        %1744 = vmatprep.subr.bf16.mxu0 %v1713
        %1745 = vmatpush1.bf16.msra.mxu0 %v1712
        %1746 = vmatprep.subr.bf16.mxu0 %v1715
        %1747 = vmatpush1.bf16.msra.mxu0 %v1714
        %1748 = vmatprep.subr.bf16.mxu0 %v1717
        %1749 = vmatpush1.bf16.msra.mxu0 %v1716
        %1750 = vmatprep.subr.bf16.mxu0 %v1719
        %1751 = vmatpush1.bf16.msra.mxu0 %v1718
        %1752 = vmatprep.subr.bf16.mxu0 0
        %1753 = vmatpush1.bf16.msra.mxu0 0
        %1754 = vmatprep.subr.bf16.mxu0 0
        %1755 = vmatpush1.bf16.msra.mxu0 0
        %1756 = vmatprep.subr.bf16.mxu0 0
        %1757 = vmatpush1.bf16.msra.mxu0 0
        %1758 = vmatprep.subr.bf16.mxu0 0
        %1759 = vmatpush1.bf16.msra.mxu0 0
        %1760 = vmatprep.subr.bf16.mxu0 0
        %1761 = vmatpush1.bf16.msra.mxu0 0
        %1762 = vmatprep.subr.bf16.mxu0 0
        %1763 = vmatpush1.bf16.msra.mxu0 0
        %1764 = vmatprep.subr.bf16.mxu0 0
        %1765 = vmatpush1.bf16.msra.mxu0 0
        %1766 = vmatprep.subr.bf16.mxu0 0
        %1767 = vmatpush1.bf16.msra.mxu0 0
        %1768 = vmatprep.mubr.bf16.mxu0 0
        %1769 = vmatmul.mubr.bf16.gmra.mrb[0].mxu0 %v1654
        %v1770 = vpop.f32.mrb[0].mxu0
        %v1771 = vadd.f32 0.0, %v1770
        %v1772 = vpop.f32.mrb[0].mxu0
        %v1773 = vadd.f32 0.0, %v1772
        %v1774 = vpop.f32.mrb[0].mxu0
        %v1775 = vadd.f32 0.0, %v1774
        %v1776 = vpop.f32.mrb[0].mxu0
        %v1777 = vadd.f32 0.0, %v1776
        %1778 = vdwg.mxu0
        %v1779 = vadd.f32 %v1615, %v1771
        %v1780 = vadd.f32 %v1616, %v1773
        %v1781 = vadd.f32 %v1617, %v1775
        %v1782 = vadd.f32 %v1618, %v1777
        %s1783 = scalar_lea.vmem [#allocation2], 512
        %v1784 = vld [vmem:[%s1783] sm:$0xff]
        %v1785 = vld [vmem:[%s1783 + $0x8] sm:$0xff]
        %v1786 = vld [vmem:[%s1783 + $0x10] sm:$0xff]
        %v1787 = vld [vmem:[%s1783 + $0x18] sm:$0xff]
        %v1788 = vld [vmem:[%s1783 + $0x20] sm:$0xff]
        %v1789 = vld [vmem:[%s1783 + $0x28] sm:$0xff]
        %v1790 = vld [vmem:[%s1783 + $0x30] sm:$0xff]
        %v1791 = vld [vmem:[%s1783 + $0x38] sm:$0xff]
        %v1792 = vld [vmem:[%s1783 + $0x40] sm:$0xff]
        %v1793 = vld [vmem:[%s1783 + $0x48] sm:$0xff]
        %v1794 = vld [vmem:[%s1783 + $0x50] sm:$0xff]
        %v1795 = vld [vmem:[%s1783 + $0x58] sm:$0xff]
        %v1796 = vld [vmem:[%s1783 + $0x60] sm:$0xff]
        %v1797 = vld [vmem:[%s1783 + $0x68] sm:$0xff]
        %v1798 = vld [vmem:[%s1783 + $0x70] sm:$0xff]
        %v1799 = vld [vmem:[%s1783 + $0x78] sm:$0xff]
        %v1801 = vunpack.c.l.b16 %v1110
        %v1802 = vrot.slane %v1158, 7
        %v1803 = vsel %vm1165, %v1802, %v1157
        %v1804 = vrot.slane %v1159, 6
        %v1805 = vsel %vm1168, %v1804, %v1803
        %v1806 = vrot.slane %v1160, 5
        %v1807 = vsel %vm1171, %v1806, %v1805
        %v1808 = vrot.slane %v1161, 4
        %v1809 = vsel %vm1174, %v1808, %v1807
        %v1810 = vrot.slane %v1162, 3
        %v1811 = vsel %vm1177, %v1810, %v1809
        %v1812 = vrot.slane %v1163, 2
        %v1813 = vsel %vm1180, %v1812, %v1811
        %v1814 = vrot.slane %v1473, 1
        %v1815 = vsel %vm1183, %v1814, %v1813
        %v1816 = vrot.slane %v1801, 7
        %v1817 = vsel %vm1165, %v1816, %v1637
        %v1818 = vpack.c.b16 %v1817, %v1815
        %v1836 = vunpack.c.l.b16 %v1784
        %v1837 = vunpack.c.h.b16 %v1784
        %v1838 = vunpack.c.l.b16 %v1785
        %v1839 = vunpack.c.h.b16 %v1785
        %v1840 = vunpack.c.l.b16 %v1786
        %v1841 = vunpack.c.h.b16 %v1786
        %v1842 = vunpack.c.l.b16 %v1787
        %v1843 = vunpack.c.h.b16 %v1787
        %v1844 = vunpack.c.l.b16 %v1788
        %v1845 = vunpack.c.h.b16 %v1788
        %v1846 = vunpack.c.l.b16 %v1789
        %v1847 = vunpack.c.h.b16 %v1789
        %v1848 = vunpack.c.l.b16 %v1790
        %v1849 = vunpack.c.h.b16 %v1790
        %v1850 = vunpack.c.l.b16 %v1791
        %v1851 = vunpack.c.h.b16 %v1791
        %v1852 = vunpack.c.l.b16 %v1792
        %v1853 = vunpack.c.h.b16 %v1792
        %v1854 = vunpack.c.l.b16 %v1793
        %v1855 = vunpack.c.h.b16 %v1793
        %v1856 = vunpack.c.l.b16 %v1794
        %v1857 = vunpack.c.h.b16 %v1794
        %v1858 = vunpack.c.l.b16 %v1795
        %v1859 = vunpack.c.h.b16 %v1795
        %v1860 = vunpack.c.l.b16 %v1796
        %v1861 = vunpack.c.h.b16 %v1796
        %v1862 = vunpack.c.l.b16 %v1797
        %v1863 = vunpack.c.h.b16 %v1797
        %v1864 = vunpack.c.l.b16 %v1798
        %v1865 = vunpack.c.h.b16 %v1798
        %v1866 = vunpack.c.l.b16 %v1799
        %v1867 = vunpack.c.h.b16 %v1799
        %v1868 = vpack.c.b16 %v1838, %v1836
        %v1869 = vpack.c.b16 %v1839, %v1837
        %v1870 = vpack.c.b16 %v1842, %v1840
        %v1871 = vpack.c.b16 %v1843, %v1841
        %v1872 = vpack.c.b16 %v1846, %v1844
        %v1873 = vpack.c.b16 %v1847, %v1845
        %v1874 = vpack.c.b16 %v1850, %v1848
        %v1875 = vpack.c.b16 %v1851, %v1849
        %v1876 = vpack.c.b16 %v1854, %v1852
        %v1877 = vpack.c.b16 %v1855, %v1853
        %v1878 = vpack.c.b16 %v1858, %v1856
        %v1879 = vpack.c.b16 %v1859, %v1857
        %v1880 = vpack.c.b16 %v1862, %v1860
        %v1881 = vpack.c.b16 %v1863, %v1861
        %v1882 = vpack.c.b16 %v1866, %v1864
        %v1883 = vpack.c.b16 %v1867, %v1865
        %1900 = vmatprep.subr.bf16.mxu0 %v1869
        %1901 = vmatpush1.bf16.msra.mxu0 %v1868
        %1902 = vmatprep.subr.bf16.mxu0 %v1871
        %1903 = vmatpush1.bf16.msra.mxu0 %v1870
        %1904 = vmatprep.subr.bf16.mxu0 %v1873
        %1905 = vmatpush1.bf16.msra.mxu0 %v1872
        %1906 = vmatprep.subr.bf16.mxu0 %v1875
        %1907 = vmatpush1.bf16.msra.mxu0 %v1874
        %1908 = vmatprep.subr.bf16.mxu0 %v1877
        %1909 = vmatpush1.bf16.msra.mxu0 %v1876
        %1910 = vmatprep.subr.bf16.mxu0 %v1879
        %1911 = vmatpush1.bf16.msra.mxu0 %v1878
        %1912 = vmatprep.subr.bf16.mxu0 %v1881
        %1913 = vmatpush1.bf16.msra.mxu0 %v1880
        %1914 = vmatprep.subr.bf16.mxu0 %v1883
        %1915 = vmatpush1.bf16.msra.mxu0 %v1882
        %1916 = vmatprep.subr.bf16.mxu0 0
        %1917 = vmatpush1.bf16.msra.mxu0 0
        %1918 = vmatprep.subr.bf16.mxu0 0
        %1919 = vmatpush1.bf16.msra.mxu0 0
        %1920 = vmatprep.subr.bf16.mxu0 0
        %1921 = vmatpush1.bf16.msra.mxu0 0
        %1922 = vmatprep.subr.bf16.mxu0 0
        %1923 = vmatpush1.bf16.msra.mxu0 0
        %1924 = vmatprep.subr.bf16.mxu0 0
        %1925 = vmatpush1.bf16.msra.mxu0 0
        %1926 = vmatprep.subr.bf16.mxu0 0
        %1927 = vmatpush1.bf16.msra.mxu0 0
        %1928 = vmatprep.subr.bf16.mxu0 0
        %1929 = vmatpush1.bf16.msra.mxu0 0
        %1930 = vmatprep.subr.bf16.mxu0 0
        %1931 = vmatpush1.bf16.msra.mxu0 0
        %1932 = vmatprep.mubr.bf16.mxu0 0
        %1933 = vmatmul.mubr.bf16.gmra.mrb[0].mxu0 %v1818
        %v1934 = vpop.f32.mrb[0].mxu0
        %v1935 = vadd.f32 0.0, %v1934
        %v1936 = vpop.f32.mrb[0].mxu0
        %v1937 = vadd.f32 0.0, %v1936
        %v1938 = vpop.f32.mrb[0].mxu0
        %v1939 = vadd.f32 0.0, %v1938
        %v1940 = vpop.f32.mrb[0].mxu0
        %v1941 = vadd.f32 0.0, %v1940
        %1942 = vdwg.mxu0
        %v1943 = vadd.f32 %v1779, %v1935
        %v1944 = vadd.f32 %v1780, %v1937
        %v1945 = vadd.f32 %v1781, %v1939
        %v1946 = vadd.f32 %v1782, %v1941
        %v1947 = vld [vmem:[%s4] sm:$0x3]
        %v1949 = vlaneseq
        %v1950 = vshrl.u32 %v1949, 7
        %v1951 = vsub.s32 0, %v1950
        %v1952 = vrot.slane %v1947, %v1951
        %v1953 = vlaneseq
        %v1954 = vshrl.u32 %v1953, 7
        %v1955 = vsub.s32 1, %v1954
        %v1956 = vrot.slane %v1947, %v1955
        %v1959 = vadd.f32 %v1943, %v1952
        %v1960 = vadd.f32 %v1944, %v1956
        %v1961 = vadd.f32 %v1945, %v1952
        %v1962 = vadd.f32 %v1946, %v1956
        %v1963 = vmax.f32 %v1959, 0.0
        %v1964 = vmax.f32 %v1960, 0.0
        %v1965 = vmax.f32 %v1961, 0.0
        %v1966 = vmax.f32 %v1962, 0.0
        %v1967 = vmax.f32 %v1963, %v1964
        %v1968 = vmax.f32 %v1965, %v1966
        %v1971 = vcombine.high %v1967, %v1967
        %v1973 = vunpack.c.l.s4 1983009808
        %v1974 = vunpack.c.0.s8 %v1973
        %v1975 = vlaneseq
        %v1976 = vshrl.u32 %v1975, 7
        %v1977 = vsub.s32 %v1974, %v1976
        %v1978 = vrot.slane %v1967, %v1977
        %v1980 = vunpack.c.l.s4 1983009808
        %v1981 = vunpack.c.0.s8 %v1980
        %v1982 = vlaneseq
        %v1983 = vshrl.u32 %v1982, 7
        %v1984 = vsub.s32 %v1981, %v1983
        %v1985 = vrot.slane %v1971, %v1984
        %v1986 = vcombine.high %v1978, %v1978
        %v1987 = vcombine.high %v1985, %v1985
        %v1989 = vunpack.c.l.s4 1983009808
        %v1990 = vunpack.c.0.s8 %v1989
        %v1991 = vlaneseq
        %v1992 = vshrl.u32 %v1991, 7
        %v1993 = vsub.s32 %v1990, %v1992
        %v1994 = vrot.slane %v1968, %v1993
        %v2000 = vrot.slane %v1978, 7
        %v2001 = vrot.slane %v2000, 2
        %v2002 = vrot.slane %v1986, 7
        %v2003 = vrot.slane %v2002, 2
        %v2004 = vrot.slane %v1985, 7
        %v2005 = vrot.slane %v2004, 2
        %v2006 = vrot.slane %v1987, 7
        %v2007 = vrot.slane %v2006, 2
        %v2008 = vrot.slane %v1994, 7
        %v2009 = vrot.slane %v2008, 2
        %v2015 = vmax.f32 %v1978, %v2001
        %v2016 = vmax.f32 %v1986, %v2003
        %v2017 = vmax.f32 %v1985, %v2005
        %v2018 = vmax.f32 %v1987, %v2007
        %v2019 = vmax.f32 %v1994, %v2009
        %v2020 = vpack.c.bf16 %v2015, %v2015
        %v2021 = vpack.c.bf16 %v2016, %v2016
        %v2022 = vpack.c.bf16 %v2017, %v2017
        %v2023 = vpack.c.bf16 %v2018, %v2018
        %v2024 = vpack.c.bf16 %v2019, %v2019
        %v2025 = vld [vmem:[#allocation5] sm:$0xf]
        %v2026 = vld [vmem:[#allocation5 + $0x4] sm:$0xf]
        %v2027 = vld [vmem:[#allocation5 + $0x8] sm:$0xf]
        %v2028 = vld [vmem:[#allocation5 + $0xc] sm:$0xf]
        %v2029 = vld [vmem:[#allocation5 + $0x10] sm:$0xf]
        %v2030 = vld [vmem:[#allocation5 + $0x14] sm:$0xf]
        %v2031 = vld [vmem:[#allocation5 + $0x18] sm:$0xf]
        %v2032 = vld [vmem:[#allocation5 + $0x1c] sm:$0xf]
        %v2033 = vld [vmem:[#allocation5 + $0x20] sm:$0xf]
        %v2034 = vld [vmem:[#allocation5 + $0x24] sm:$0xf]
        %v2035 = vld [vmem:[#allocation5 + $0x28] sm:$0xf]
        %v2036 = vld [vmem:[#allocation5 + $0x2c] sm:$0xf]
        %v2037 = vld [vmem:[#allocation5 + $0x30] sm:$0xf]
        %v2038 = vld [vmem:[#allocation5 + $0x34] sm:$0xf]
        %v2039 = vld [vmem:[#allocation5 + $0x38] sm:$0xf]
        %v2040 = vld [vmem:[#allocation5 + $0x3c] sm:$0xf]
        %s2041 = scalar_lea.vmem [#allocation5], 64
        %v2042 = vld [vmem:[%s2041] sm:$0xf]
        %v2043 = vld [vmem:[%s2041 + $0x4] sm:$0xf]
        %v2044 = vld [vmem:[%s2041 + $0x8] sm:$0xf]
        %v2045 = vld [vmem:[%s2041 + $0xc] sm:$0xf]
        %v2046 = vld [vmem:[%s2041 + $0x10] sm:$0xf]
        %v2047 = vld [vmem:[%s2041 + $0x14] sm:$0xf]
        %v2048 = vld [vmem:[%s2041 + $0x18] sm:$0xf]
        %v2049 = vld [vmem:[%s2041 + $0x1c] sm:$0xf]
        %v2050 = vld [vmem:[%s2041 + $0x20] sm:$0xf]
        %v2051 = vld [vmem:[%s2041 + $0x24] sm:$0xf]
        %v2052 = vld [vmem:[%s2041 + $0x28] sm:$0xf]
        %v2053 = vld [vmem:[%s2041 + $0x2c] sm:$0xf]
        %v2054 = vld [vmem:[%s2041 + $0x30] sm:$0xf]
        %v2055 = vld [vmem:[%s2041 + $0x34] sm:$0xf]
        %v2056 = vld [vmem:[%s2041 + $0x38] sm:$0xf]
        %v2057 = vld [vmem:[%s2041 + $0x3c] sm:$0xf]
        %v2074 = vunpack.c.l.b16 %v2042
        %v2075 = vunpack.c.l.b16 %v2043
        %v2076 = vunpack.c.l.b16 %v2044
        %v2077 = vunpack.c.l.b16 %v2045
        %v2078 = vunpack.c.l.b16 %v2046
        %v2079 = vunpack.c.l.b16 %v2047
        %v2080 = vunpack.c.l.b16 %v2048
        %v2081 = vunpack.c.l.b16 %v2049
        %v2082 = vunpack.c.l.b16 %v2050
        %v2083 = vunpack.c.l.b16 %v2051
        %v2084 = vunpack.c.l.b16 %v2052
        %v2085 = vunpack.c.l.b16 %v2053
        %v2086 = vunpack.c.l.b16 %v2054
        %v2087 = vunpack.c.l.b16 %v2055
        %v2088 = vunpack.c.l.b16 %v2056
        %v2089 = vunpack.c.l.b16 %v2057
        %v2090 = vpack.c.b16 %v2075, %v2074
        %v2091 = vpack.c.b16 %v2077, %v2076
        %v2092 = vpack.c.b16 %v2079, %v2078
        %v2093 = vpack.c.b16 %v2081, %v2080
        %v2094 = vpack.c.b16 %v2083, %v2082
        %v2095 = vpack.c.b16 %v2085, %v2084
        %v2096 = vpack.c.b16 %v2087, %v2086
        %v2097 = vpack.c.b16 %v2089, %v2088
        %2106 = vmatprep.subr.bf16.mxu0 0
        %2107 = vmatpush1.bf16.msra.mxu0 %v2090
        %2108 = vmatprep.subr.bf16.mxu0 0
        %2109 = vmatpush1.bf16.msra.mxu0 %v2091
        %2110 = vmatprep.subr.bf16.mxu0 0
        %2111 = vmatpush1.bf16.msra.mxu0 %v2092
        %2112 = vmatprep.subr.bf16.mxu0 0
        %2113 = vmatpush1.bf16.msra.mxu0 %v2093
        %2114 = vmatprep.subr.bf16.mxu0 0
        %2115 = vmatpush1.bf16.msra.mxu0 %v2094
        %2116 = vmatprep.subr.bf16.mxu0 0
        %2117 = vmatpush1.bf16.msra.mxu0 %v2095
        %2118 = vmatprep.subr.bf16.mxu0 0
        %2119 = vmatpush1.bf16.msra.mxu0 %v2096
        %2120 = vmatprep.subr.bf16.mxu0 0
        %2121 = vmatpush1.bf16.msra.mxu0 %v2097
        %2122 = vmatprep.subr.bf16.mxu0 0
        %2123 = vmatpush1.bf16.msra.mxu0 0
        %2124 = vmatprep.subr.bf16.mxu0 0
        %2125 = vmatpush1.bf16.msra.mxu0 0
        %2126 = vmatprep.subr.bf16.mxu0 0
        %2127 = vmatpush1.bf16.msra.mxu0 0
        %2128 = vmatprep.subr.bf16.mxu0 0
        %2129 = vmatpush1.bf16.msra.mxu0 0
        %2130 = vmatprep.subr.bf16.mxu0 0
        %2131 = vmatpush1.bf16.msra.mxu0 0
        %2132 = vmatprep.subr.bf16.mxu0 0
        %2133 = vmatpush1.bf16.msra.mxu0 0
        %2134 = vmatprep.subr.bf16.mxu0 0
        %2135 = vmatpush1.bf16.msra.mxu0 0
        %2136 = vmatprep.subr.bf16.mxu0 0
        %2137 = vmatpush1.bf16.msra.mxu0 0
        %2138 = vmatprep.mubr.bf16.mxu0 0
        %2139 = vmatmul.mubr.bf16.gmra.mrb[0].mxu0 %v2021
        %v2140 = vpop.f32.mrb[0].mxu0
        %v2141 = vadd.f32 0.0, %v2140
        %v2142 = vpop.f32.mrb[0].mxu0
        %v2143 = vpop.f32.mrb[0].mxu0
        %v2144 = vpop.f32.mrb[0].mxu0
        %2145 = vdwg.mxu0
        %v2162 = vunpack.c.l.b16 %v2025
        %v2163 = vunpack.c.l.b16 %v2026
        %v2164 = vunpack.c.l.b16 %v2027
        %v2165 = vunpack.c.l.b16 %v2028
        %v2166 = vunpack.c.l.b16 %v2029
        %v2167 = vunpack.c.l.b16 %v2030
        %v2168 = vunpack.c.l.b16 %v2031
        %v2169 = vunpack.c.l.b16 %v2032
        %v2170 = vunpack.c.l.b16 %v2033
        %v2171 = vunpack.c.l.b16 %v2034
        %v2172 = vunpack.c.l.b16 %v2035
        %v2173 = vunpack.c.l.b16 %v2036
        %v2174 = vunpack.c.l.b16 %v2037
        %v2175 = vunpack.c.l.b16 %v2038
        %v2176 = vunpack.c.l.b16 %v2039
        %v2177 = vunpack.c.l.b16 %v2040
        %v2178 = vpack.c.b16 %v2163, %v2162
        %v2179 = vpack.c.b16 %v2165, %v2164
        %v2180 = vpack.c.b16 %v2167, %v2166
        %v2181 = vpack.c.b16 %v2169, %v2168
        %v2182 = vpack.c.b16 %v2171, %v2170
        %v2183 = vpack.c.b16 %v2173, %v2172
        %v2184 = vpack.c.b16 %v2175, %v2174
        %v2185 = vpack.c.b16 %v2177, %v2176
        %2194 = vmatprep.subr.bf16.mxu0 0
        %2195 = vmatpush1.bf16.msra.mxu0 %v2178
        %2196 = vmatprep.subr.bf16.mxu0 0
        %2197 = vmatpush1.bf16.msra.mxu0 %v2179
        %2198 = vmatprep.subr.bf16.mxu0 0
        %2199 = vmatpush1.bf16.msra.mxu0 %v2180
        %2200 = vmatprep.subr.bf16.mxu0 0
        %2201 = vmatpush1.bf16.msra.mxu0 %v2181
        %2202 = vmatprep.subr.bf16.mxu0 0
        %2203 = vmatpush1.bf16.msra.mxu0 %v2182
        %2204 = vmatprep.subr.bf16.mxu0 0
        %2205 = vmatpush1.bf16.msra.mxu0 %v2183
        %2206 = vmatprep.subr.bf16.mxu0 0
        %2207 = vmatpush1.bf16.msra.mxu0 %v2184
        %2208 = vmatprep.subr.bf16.mxu0 0
        %2209 = vmatpush1.bf16.msra.mxu0 %v2185
        %2210 = vmatprep.subr.bf16.mxu0 0
        %2211 = vmatpush1.bf16.msra.mxu0 0
        %2212 = vmatprep.subr.bf16.mxu0 0
        %2213 = vmatpush1.bf16.msra.mxu0 0
        %2214 = vmatprep.subr.bf16.mxu0 0
        %2215 = vmatpush1.bf16.msra.mxu0 0
        %2216 = vmatprep.subr.bf16.mxu0 0
        %2217 = vmatpush1.bf16.msra.mxu0 0
        %2218 = vmatprep.subr.bf16.mxu0 0
        %2219 = vmatpush1.bf16.msra.mxu0 0
        %2220 = vmatprep.subr.bf16.mxu0 0
        %2221 = vmatpush1.bf16.msra.mxu0 0
        %2222 = vmatprep.subr.bf16.mxu0 0
        %2223 = vmatpush1.bf16.msra.mxu0 0
        %2224 = vmatprep.subr.bf16.mxu0 0
        %2225 = vmatpush1.bf16.msra.mxu0 0
        %2226 = vmatprep.mubr.bf16.mxu0 0
        %2227 = vmatmul.mubr.bf16.gmra.mrb[0].mxu0 %v2020
        %v2228 = vpop.f32.mrb[0].mxu0
        %v2229 = vadd.f32 %v2141, %v2228
        %v2230 = vpop.f32.mrb[0].mxu0
        %v2231 = vpop.f32.mrb[0].mxu0
        %v2232 = vpop.f32.mrb[0].mxu0
        %2233 = vdwg.mxu0
        %s2234 = scalar_lea.vmem [#allocation5], 128
        %v2235 = vld [vmem:[%s2234] sm:$0xf]
        %v2236 = vld [vmem:[%s2234 + $0x4] sm:$0xf]
        %v2237 = vld [vmem:[%s2234 + $0x8] sm:$0xf]
        %v2238 = vld [vmem:[%s2234 + $0xc] sm:$0xf]
        %v2239 = vld [vmem:[%s2234 + $0x10] sm:$0xf]
        %v2240 = vld [vmem:[%s2234 + $0x14] sm:$0xf]
        %v2241 = vld [vmem:[%s2234 + $0x18] sm:$0xf]
        %v2242 = vld [vmem:[%s2234 + $0x1c] sm:$0xf]
        %v2243 = vld [vmem:[%s2234 + $0x20] sm:$0xf]
        %v2244 = vld [vmem:[%s2234 + $0x24] sm:$0xf]
        %v2245 = vld [vmem:[%s2234 + $0x28] sm:$0xf]
        %v2246 = vld [vmem:[%s2234 + $0x2c] sm:$0xf]
        %v2247 = vld [vmem:[%s2234 + $0x30] sm:$0xf]
        %v2248 = vld [vmem:[%s2234 + $0x34] sm:$0xf]
        %v2249 = vld [vmem:[%s2234 + $0x38] sm:$0xf]
        %v2250 = vld [vmem:[%s2234 + $0x3c] sm:$0xf]
        %v2267 = vunpack.c.l.b16 %v2235
        %v2268 = vunpack.c.l.b16 %v2236
        %v2269 = vunpack.c.l.b16 %v2237
        %v2270 = vunpack.c.l.b16 %v2238
        %v2271 = vunpack.c.l.b16 %v2239
        %v2272 = vunpack.c.l.b16 %v2240
        %v2273 = vunpack.c.l.b16 %v2241
        %v2274 = vunpack.c.l.b16 %v2242
        %v2275 = vunpack.c.l.b16 %v2243
        %v2276 = vunpack.c.l.b16 %v2244
        %v2277 = vunpack.c.l.b16 %v2245
        %v2278 = vunpack.c.l.b16 %v2246
        %v2279 = vunpack.c.l.b16 %v2247
        %v2280 = vunpack.c.l.b16 %v2248
        %v2281 = vunpack.c.l.b16 %v2249
        %v2282 = vunpack.c.l.b16 %v2250
        %v2283 = vpack.c.b16 %v2268, %v2267
        %v2284 = vpack.c.b16 %v2270, %v2269
        %v2285 = vpack.c.b16 %v2272, %v2271
        %v2286 = vpack.c.b16 %v2274, %v2273
        %v2287 = vpack.c.b16 %v2276, %v2275
        %v2288 = vpack.c.b16 %v2278, %v2277
        %v2289 = vpack.c.b16 %v2280, %v2279
        %v2290 = vpack.c.b16 %v2282, %v2281
        %2299 = vmatprep.subr.bf16.mxu0 0
        %2300 = vmatpush1.bf16.msra.mxu0 %v2283
        %2301 = vmatprep.subr.bf16.mxu0 0
        %2302 = vmatpush1.bf16.msra.mxu0 %v2284
        %2303 = vmatprep.subr.bf16.mxu0 0
        %2304 = vmatpush1.bf16.msra.mxu0 %v2285
        %2305 = vmatprep.subr.bf16.mxu0 0
        %2306 = vmatpush1.bf16.msra.mxu0 %v2286
        %2307 = vmatprep.subr.bf16.mxu0 0
        %2308 = vmatpush1.bf16.msra.mxu0 %v2287
        %2309 = vmatprep.subr.bf16.mxu0 0
        %2310 = vmatpush1.bf16.msra.mxu0 %v2288
        %2311 = vmatprep.subr.bf16.mxu0 0
        %2312 = vmatpush1.bf16.msra.mxu0 %v2289
        %2313 = vmatprep.subr.bf16.mxu0 0
        %2314 = vmatpush1.bf16.msra.mxu0 %v2290
        %2315 = vmatprep.subr.bf16.mxu0 0
        %2316 = vmatpush1.bf16.msra.mxu0 0
        %2317 = vmatprep.subr.bf16.mxu0 0
        %2318 = vmatpush1.bf16.msra.mxu0 0
        %2319 = vmatprep.subr.bf16.mxu0 0
        %2320 = vmatpush1.bf16.msra.mxu0 0
        %2321 = vmatprep.subr.bf16.mxu0 0
        %2322 = vmatpush1.bf16.msra.mxu0 0
        %2323 = vmatprep.subr.bf16.mxu0 0
        %2324 = vmatpush1.bf16.msra.mxu0 0
        %2325 = vmatprep.subr.bf16.mxu0 0
        %2326 = vmatpush1.bf16.msra.mxu0 0
        %2327 = vmatprep.subr.bf16.mxu0 0
        %2328 = vmatpush1.bf16.msra.mxu0 0
        %2329 = vmatprep.subr.bf16.mxu0 0
        %2330 = vmatpush1.bf16.msra.mxu0 0
        %2331 = vmatprep.mubr.bf16.mxu0 0
        %2332 = vmatmul.mubr.bf16.gmra.mrb[0].mxu0 %v2022
        %v2333 = vpop.f32.mrb[0].mxu0
        %v2334 = vadd.f32 0.0, %v2333
        %v2335 = vpop.f32.mrb[0].mxu0
        %v2336 = vpop.f32.mrb[0].mxu0
        %v2337 = vpop.f32.mrb[0].mxu0
        %2338 = vdwg.mxu0
        %v2339 = vadd.f32 %v2229, %v2334
        %s2340 = scalar_lea.vmem [#allocation5], 192
        %v2341 = vld [vmem:[%s2340] sm:$0xf]
        %v2342 = vld [vmem:[%s2340 + $0x4] sm:$0xf]
        %v2343 = vld [vmem:[%s2340 + $0x8] sm:$0xf]
        %v2344 = vld [vmem:[%s2340 + $0xc] sm:$0xf]
        %v2345 = vld [vmem:[%s2340 + $0x10] sm:$0xf]
        %v2346 = vld [vmem:[%s2340 + $0x14] sm:$0xf]
        %v2347 = vld [vmem:[%s2340 + $0x18] sm:$0xf]
        %v2348 = vld [vmem:[%s2340 + $0x1c] sm:$0xf]
        %v2349 = vld [vmem:[%s2340 + $0x20] sm:$0xf]
        %v2350 = vld [vmem:[%s2340 + $0x24] sm:$0xf]
        %v2351 = vld [vmem:[%s2340 + $0x28] sm:$0xf]
        %v2352 = vld [vmem:[%s2340 + $0x2c] sm:$0xf]
        %v2353 = vld [vmem:[%s2340 + $0x30] sm:$0xf]
        %v2354 = vld [vmem:[%s2340 + $0x34] sm:$0xf]
        %v2355 = vld [vmem:[%s2340 + $0x38] sm:$0xf]
        %v2356 = vld [vmem:[%s2340 + $0x3c] sm:$0xf]
        %v2373 = vunpack.c.l.b16 %v2341
        %v2374 = vunpack.c.l.b16 %v2342
        %v2375 = vunpack.c.l.b16 %v2343
        %v2376 = vunpack.c.l.b16 %v2344
        %v2377 = vunpack.c.l.b16 %v2345
        %v2378 = vunpack.c.l.b16 %v2346
        %v2379 = vunpack.c.l.b16 %v2347
        %v2380 = vunpack.c.l.b16 %v2348
        %v2381 = vunpack.c.l.b16 %v2349
        %v2382 = vunpack.c.l.b16 %v2350
        %v2383 = vunpack.c.l.b16 %v2351
        %v2384 = vunpack.c.l.b16 %v2352
        %v2385 = vunpack.c.l.b16 %v2353
        %v2386 = vunpack.c.l.b16 %v2354
        %v2387 = vunpack.c.l.b16 %v2355
        %v2388 = vunpack.c.l.b16 %v2356
        %v2389 = vpack.c.b16 %v2374, %v2373
        %v2390 = vpack.c.b16 %v2376, %v2375
        %v2391 = vpack.c.b16 %v2378, %v2377
        %v2392 = vpack.c.b16 %v2380, %v2379
        %v2393 = vpack.c.b16 %v2382, %v2381
        %v2394 = vpack.c.b16 %v2384, %v2383
        %v2395 = vpack.c.b16 %v2386, %v2385
        %v2396 = vpack.c.b16 %v2388, %v2387
        %2405 = vmatprep.subr.bf16.mxu0 0
        %2406 = vmatpush1.bf16.msra.mxu0 %v2389
        %2407 = vmatprep.subr.bf16.mxu0 0
        %2408 = vmatpush1.bf16.msra.mxu0 %v2390
        %2409 = vmatprep.subr.bf16.mxu0 0
        %2410 = vmatpush1.bf16.msra.mxu0 %v2391
        %2411 = vmatprep.subr.bf16.mxu0 0
        %2412 = vmatpush1.bf16.msra.mxu0 %v2392
        %2413 = vmatprep.subr.bf16.mxu0 0
        %2414 = vmatpush1.bf16.msra.mxu0 %v2393
        %2415 = vmatprep.subr.bf16.mxu0 0
        %2416 = vmatpush1.bf16.msra.mxu0 %v2394
        %2417 = vmatprep.subr.bf16.mxu0 0
        %2418 = vmatpush1.bf16.msra.mxu0 %v2395
        %2419 = vmatprep.subr.bf16.mxu0 0
        %2420 = vmatpush1.bf16.msra.mxu0 %v2396
        %2421 = vmatprep.subr.bf16.mxu0 0
        %2422 = vmatpush1.bf16.msra.mxu0 0
        %2423 = vmatprep.subr.bf16.mxu0 0
        %2424 = vmatpush1.bf16.msra.mxu0 0
        %2425 = vmatprep.subr.bf16.mxu0 0
        %2426 = vmatpush1.bf16.msra.mxu0 0
        %2427 = vmatprep.subr.bf16.mxu0 0
        %2428 = vmatpush1.bf16.msra.mxu0 0
        %2429 = vmatprep.subr.bf16.mxu0 0
        %2430 = vmatpush1.bf16.msra.mxu0 0
        %2431 = vmatprep.subr.bf16.mxu0 0
        %2432 = vmatpush1.bf16.msra.mxu0 0
        %2433 = vmatprep.subr.bf16.mxu0 0
        %2434 = vmatpush1.bf16.msra.mxu0 0
        %2435 = vmatprep.subr.bf16.mxu0 0
        %2436 = vmatpush1.bf16.msra.mxu0 0
        %2437 = vmatprep.mubr.bf16.mxu0 0
        %2438 = vmatmul.mubr.bf16.gmra.mrb[0].mxu0 %v2023
        %v2439 = vpop.f32.mrb[0].mxu0
        %v2440 = vadd.f32 0.0, %v2439
        %v2441 = vpop.f32.mrb[0].mxu0
        %v2442 = vpop.f32.mrb[0].mxu0
        %v2443 = vpop.f32.mrb[0].mxu0
        %2444 = vdwg.mxu0
        %v2445 = vadd.f32 %v2339, %v2440
        %s2446 = scalar_lea.vmem [#allocation5], 256
        %v2447 = vld [vmem:[%s2446] sm:$0xf]
        %v2448 = vld [vmem:[%s2446 + $0x4] sm:$0xf]
        %v2449 = vld [vmem:[%s2446 + $0x8] sm:$0xf]
        %v2450 = vld [vmem:[%s2446 + $0xc] sm:$0xf]
        %v2451 = vld [vmem:[%s2446 + $0x10] sm:$0xf]
        %v2452 = vld [vmem:[%s2446 + $0x14] sm:$0xf]
        %v2453 = vld [vmem:[%s2446 + $0x18] sm:$0xf]
        %v2454 = vld [vmem:[%s2446 + $0x1c] sm:$0xf]
        %v2455 = vld [vmem:[%s2446 + $0x20] sm:$0xf]
        %v2456 = vld [vmem:[%s2446 + $0x24] sm:$0xf]
        %v2457 = vld [vmem:[%s2446 + $0x28] sm:$0xf]
        %v2458 = vld [vmem:[%s2446 + $0x2c] sm:$0xf]
        %v2459 = vld [vmem:[%s2446 + $0x30] sm:$0xf]
        %v2460 = vld [vmem:[%s2446 + $0x34] sm:$0xf]
        %v2461 = vld [vmem:[%s2446 + $0x38] sm:$0xf]
        %v2462 = vld [vmem:[%s2446 + $0x3c] sm:$0xf]
        %v2479 = vunpack.c.l.b16 %v2447
        %v2480 = vunpack.c.l.b16 %v2448
        %v2481 = vunpack.c.l.b16 %v2449
        %v2482 = vunpack.c.l.b16 %v2450
        %v2483 = vunpack.c.l.b16 %v2451
        %v2484 = vunpack.c.l.b16 %v2452
        %v2485 = vunpack.c.l.b16 %v2453
        %v2486 = vunpack.c.l.b16 %v2454
        %v2487 = vunpack.c.l.b16 %v2455
        %v2488 = vunpack.c.l.b16 %v2456
        %v2489 = vunpack.c.l.b16 %v2457
        %v2490 = vunpack.c.l.b16 %v2458
        %v2491 = vunpack.c.l.b16 %v2459
        %v2492 = vunpack.c.l.b16 %v2460
        %v2493 = vunpack.c.l.b16 %v2461
        %v2494 = vunpack.c.l.b16 %v2462
        %v2495 = vpack.c.b16 %v2480, %v2479
        %v2496 = vpack.c.b16 %v2482, %v2481
        %v2497 = vpack.c.b16 %v2484, %v2483
        %v2498 = vpack.c.b16 %v2486, %v2485
        %v2499 = vpack.c.b16 %v2488, %v2487
        %v2500 = vpack.c.b16 %v2490, %v2489
        %v2501 = vpack.c.b16 %v2492, %v2491
        %v2502 = vpack.c.b16 %v2494, %v2493
        %2511 = vmatprep.subr.bf16.mxu0 0
        %2512 = vmatpush1.bf16.msra.mxu0 %v2495
        %2513 = vmatprep.subr.bf16.mxu0 0
        %2514 = vmatpush1.bf16.msra.mxu0 %v2496
        %2515 = vmatprep.subr.bf16.mxu0 0
        %2516 = vmatpush1.bf16.msra.mxu0 %v2497
        %2517 = vmatprep.subr.bf16.mxu0 0
        %2518 = vmatpush1.bf16.msra.mxu0 %v2498
        %2519 = vmatprep.subr.bf16.mxu0 0
        %2520 = vmatpush1.bf16.msra.mxu0 %v2499
        %2521 = vmatprep.subr.bf16.mxu0 0
        %2522 = vmatpush1.bf16.msra.mxu0 %v2500
        %2523 = vmatprep.subr.bf16.mxu0 0
        %2524 = vmatpush1.bf16.msra.mxu0 %v2501
        %2525 = vmatprep.subr.bf16.mxu0 0
        %2526 = vmatpush1.bf16.msra.mxu0 %v2502
        %2527 = vmatprep.subr.bf16.mxu0 0
        %2528 = vmatpush1.bf16.msra.mxu0 0
        %2529 = vmatprep.subr.bf16.mxu0 0
        %2530 = vmatpush1.bf16.msra.mxu0 0
        %2531 = vmatprep.subr.bf16.mxu0 0
        %2532 = vmatpush1.bf16.msra.mxu0 0
        %2533 = vmatprep.subr.bf16.mxu0 0
        %2534 = vmatpush1.bf16.msra.mxu0 0
        %2535 = vmatprep.subr.bf16.mxu0 0
        %2536 = vmatpush1.bf16.msra.mxu0 0
        %2537 = vmatprep.subr.bf16.mxu0 0
        %2538 = vmatpush1.bf16.msra.mxu0 0
        %2539 = vmatprep.subr.bf16.mxu0 0
        %2540 = vmatpush1.bf16.msra.mxu0 0
        %2541 = vmatprep.subr.bf16.mxu0 0
        %2542 = vmatpush1.bf16.msra.mxu0 0
        %2543 = vmatprep.mubr.bf16.mxu0 0
        %2544 = vmatmul.mubr.bf16.gmra.mrb[0].mxu0 %v2024
        %v2545 = vpop.f32.mrb[0].mxu0
        %v2546 = vadd.f32 0.0, %v2545
        %v2547 = vpop.f32.mrb[0].mxu0
        %v2548 = vpop.f32.mrb[0].mxu0
        %v2549 = vpop.f32.mrb[0].mxu0
        %2550 = vdwg.mxu0
        %v2551 = vadd.f32 %v2445, %v2546
        %v2552 = vld [vmem:[%s6] sm:$0x1]
        %v2553 = vadd.f32 %v2551, %v2552
        %v2554 = vmax.f32 %v2553, 0.0
        %v2555 = vpack.c.bf16 %v2554, %v2554
        %v2556 = vld [vmem:[#allocation7] sm:$0xf]
        %v2557 = vld [vmem:[#allocation7 + $0x4] sm:$0xf]
        %v2558 = vld [vmem:[#allocation7 + $0x8] sm:$0xf]
        %v2559 = vld [vmem:[#allocation7 + $0xc] sm:$0xf]
        %v2560 = vld [vmem:[#allocation7 + $0x10] sm:$0xf]
        %v2561 = vld [vmem:[#allocation7 + $0x14] sm:$0xf]
        %v2562 = vld [vmem:[#allocation7 + $0x18] sm:$0xf]
        %v2563 = vld [vmem:[#allocation7 + $0x1c] sm:$0xf]
        %v2564 = vld [vmem:[#allocation7 + $0x20] sm:$0xf]
        %v2565 = vld [vmem:[#allocation7 + $0x24] sm:$0xf]
        %v2566 = vld [vmem:[#allocation7 + $0x28] sm:$0xf]
        %v2567 = vld [vmem:[#allocation7 + $0x2c] sm:$0xf]
        %v2568 = vld [vmem:[#allocation7 + $0x30] sm:$0xf]
        %v2569 = vld [vmem:[#allocation7 + $0x34] sm:$0xf]
        %v2570 = vld [vmem:[#allocation7 + $0x38] sm:$0xf]
        %v2571 = vld [vmem:[#allocation7 + $0x3c] sm:$0xf]
        %v2572 = vld [vmem:[%s8] sm:$0x1]
        %v2589 = vunpack.c.l.b16 %v2556
        %v2590 = vunpack.c.l.b16 %v2557
        %v2591 = vunpack.c.l.b16 %v2558
        %v2592 = vunpack.c.l.b16 %v2559
        %v2593 = vunpack.c.l.b16 %v2560
        %v2594 = vunpack.c.l.b16 %v2561
        %v2595 = vunpack.c.l.b16 %v2562
        %v2596 = vunpack.c.l.b16 %v2563
        %v2597 = vunpack.c.l.b16 %v2564
        %v2598 = vunpack.c.l.b16 %v2565
        %v2599 = vunpack.c.l.b16 %v2566
        %v2600 = vunpack.c.l.b16 %v2567
        %v2601 = vunpack.c.l.b16 %v2568
        %v2602 = vunpack.c.l.b16 %v2569
        %v2603 = vunpack.c.l.b16 %v2570
        %v2604 = vunpack.c.l.b16 %v2571
        %v2605 = vpack.c.b16 %v2590, %v2589
        %v2606 = vpack.c.b16 %v2592, %v2591
        %v2607 = vpack.c.b16 %v2594, %v2593
        %v2608 = vpack.c.b16 %v2596, %v2595
        %v2609 = vpack.c.b16 %v2598, %v2597
        %v2610 = vpack.c.b16 %v2600, %v2599
        %v2611 = vpack.c.b16 %v2602, %v2601
        %v2612 = vpack.c.b16 %v2604, %v2603
        %2621 = vmatprep.subr.bf16.mxu0 0
        %2622 = vmatpush1.bf16.msra.mxu0 %v2605
        %2623 = vmatprep.subr.bf16.mxu0 0
        %2624 = vmatpush1.bf16.msra.mxu0 %v2606
        %2625 = vmatprep.subr.bf16.mxu0 0
        %2626 = vmatpush1.bf16.msra.mxu0 %v2607
        %2627 = vmatprep.subr.bf16.mxu0 0
        %2628 = vmatpush1.bf16.msra.mxu0 %v2608
        %2629 = vmatprep.subr.bf16.mxu0 0
        %2630 = vmatpush1.bf16.msra.mxu0 %v2609
        %2631 = vmatprep.subr.bf16.mxu0 0
        %2632 = vmatpush1.bf16.msra.mxu0 %v2610
        %2633 = vmatprep.subr.bf16.mxu0 0
        %2634 = vmatpush1.bf16.msra.mxu0 %v2611
        %2635 = vmatprep.subr.bf16.mxu0 0
        %2636 = vmatpush1.bf16.msra.mxu0 %v2612
        %2637 = vmatprep.subr.bf16.mxu0 0
        %2638 = vmatpush1.bf16.msra.mxu0 0
        %2639 = vmatprep.subr.bf16.mxu0 0
        %2640 = vmatpush1.bf16.msra.mxu0 0
        %2641 = vmatprep.subr.bf16.mxu0 0
        %2642 = vmatpush1.bf16.msra.mxu0 0
        %2643 = vmatprep.subr.bf16.mxu0 0
        %2644 = vmatpush1.bf16.msra.mxu0 0
        %2645 = vmatprep.subr.bf16.mxu0 0
        %2646 = vmatpush1.bf16.msra.mxu0 0
        %2647 = vmatprep.subr.bf16.mxu0 0
        %2648 = vmatpush1.bf16.msra.mxu0 0
        %2649 = vmatprep.subr.bf16.mxu0 0
        %2650 = vmatpush1.bf16.msra.mxu0 0
        %2651 = vmatprep.subr.bf16.mxu0 0
        %2652 = vmatpush1.bf16.msra.mxu0 0
        %2653 = vmatprep.mubr.bf16.mxu0 0
        %2654 = vmatmul.mubr.bf16.gmra.mrb[0].mxu0 %v2555
        %v2655 = vpop.f32.mrb[0].mxu0
        %v2656 = vadd.f32 %v2572, %v2655
        %v2657 = vpop.f32.mrb[0].mxu0
        %v2658 = vpop.f32.mrb[0].mxu0
        %v2659 = vpop.f32.mrb[0].mxu0
        %2660 = vdwg.mxu0
        %v2661 = vmax.f32 %v2656, 0.0
        %v2662 = vpack.c.bf16 %v2661, %v2661
        %v2663 = vld [vmem:[#allocation8] sm:$0xf]
        %v2664 = vld [vmem:[#allocation8 + $0x4] sm:$0xf]
        %v2665 = vld [vmem:[#allocation8 + $0x8] sm:$0xf]
        %v2666 = vld [vmem:[#allocation8 + $0xc] sm:$0xf]
        %v2667 = vld [vmem:[#allocation8 + $0x10] sm:$0xf]
        %v2668 = vld [vmem:[#allocation8 + $0x14] sm:$0xf]
        %v2669 = vld [vmem:[#allocation8 + $0x18] sm:$0xf]
        %v2670 = vld [vmem:[#allocation8 + $0x1c] sm:$0xf]
        %v2671 = vld [vmem:[#allocation8 + $0x20] sm:$0xf]
        %v2672 = vld [vmem:[#allocation8 + $0x24] sm:$0xf]
        %v2673 = vld [vmem:[#allocation8 + $0x28] sm:$0xf]
        %v2674 = vld [vmem:[#allocation8 + $0x2c] sm:$0xf]
        %v2675 = vld [vmem:[#allocation8 + $0x30] sm:$0xf]
        %v2676 = vld [vmem:[#allocation8 + $0x34] sm:$0xf]
        %v2677 = vld [vmem:[#allocation8 + $0x38] sm:$0xf]
        %v2678 = vld [vmem:[#allocation8 + $0x3c] sm:$0xf]
        %v2679 = vld [vmem:[%s10] sm:$0x1]
        %v2696 = vunpack.c.l.b16 %v2663
        %v2697 = vunpack.c.l.b16 %v2664
        %v2698 = vunpack.c.l.b16 %v2665
        %v2699 = vunpack.c.l.b16 %v2666
        %v2700 = vunpack.c.l.b16 %v2667
        %v2701 = vunpack.c.l.b16 %v2668
        %v2702 = vunpack.c.l.b16 %v2669
        %v2703 = vunpack.c.l.b16 %v2670
        %v2704 = vunpack.c.l.b16 %v2671
        %v2705 = vunpack.c.l.b16 %v2672
        %v2706 = vunpack.c.l.b16 %v2673
        %v2707 = vunpack.c.l.b16 %v2674
        %v2708 = vunpack.c.l.b16 %v2675
        %v2709 = vunpack.c.l.b16 %v2676
        %v2710 = vunpack.c.l.b16 %v2677
        %v2711 = vunpack.c.l.b16 %v2678
        %v2712 = vpack.c.b16 %v2697, %v2696
        %v2713 = vpack.c.b16 %v2699, %v2698
        %v2714 = vpack.c.b16 %v2701, %v2700
        %v2715 = vpack.c.b16 %v2703, %v2702
        %v2716 = vpack.c.b16 %v2705, %v2704
        %v2717 = vpack.c.b16 %v2707, %v2706
        %v2718 = vpack.c.b16 %v2709, %v2708
        %v2719 = vpack.c.b16 %v2711, %v2710
        %2728 = vmatprep.subr.bf16.mxu0 0
        %2729 = vmatpush1.bf16.msra.mxu0 %v2712
        %2730 = vmatprep.subr.bf16.mxu0 0
        %2731 = vmatpush1.bf16.msra.mxu0 %v2713
        %2732 = vmatprep.subr.bf16.mxu0 0
        %2733 = vmatpush1.bf16.msra.mxu0 %v2714
        %2734 = vmatprep.subr.bf16.mxu0 0
        %2735 = vmatpush1.bf16.msra.mxu0 %v2715
        %2736 = vmatprep.subr.bf16.mxu0 0
        %2737 = vmatpush1.bf16.msra.mxu0 %v2716
        %2738 = vmatprep.subr.bf16.mxu0 0
        %2739 = vmatpush1.bf16.msra.mxu0 %v2717
        %2740 = vmatprep.subr.bf16.mxu0 0
        %2741 = vmatpush1.bf16.msra.mxu0 %v2718
        %2742 = vmatprep.subr.bf16.mxu0 0
        %2743 = vmatpush1.bf16.msra.mxu0 %v2719
        %2744 = vmatprep.subr.bf16.mxu0 0
        %2745 = vmatpush1.bf16.msra.mxu0 0
        %2746 = vmatprep.subr.bf16.mxu0 0
        %2747 = vmatpush1.bf16.msra.mxu0 0
        %2748 = vmatprep.subr.bf16.mxu0 0
        %2749 = vmatpush1.bf16.msra.mxu0 0
        %2750 = vmatprep.subr.bf16.mxu0 0
        %2751 = vmatpush1.bf16.msra.mxu0 0
        %2752 = vmatprep.subr.bf16.mxu0 0
        %2753 = vmatpush1.bf16.msra.mxu0 0
        %2754 = vmatprep.subr.bf16.mxu0 0
        %2755 = vmatpush1.bf16.msra.mxu0 0
        %2756 = vmatprep.subr.bf16.mxu0 0
        %2757 = vmatpush1.bf16.msra.mxu0 0
        %2758 = vmatprep.subr.bf16.mxu0 0
        %2759 = vmatpush1.bf16.msra.mxu0 0
        %2760 = vmatprep.mubr.bf16.mxu0 0
        %2761 = vmatmul.mubr.bf16.gmra.mrb[0].mxu0 %v2662
        %v2762 = vpop.f32.mrb[0].mxu0
        %v2763 = vadd.f32 %v2679, %v2762
        %v2764 = vpop.f32.mrb[0].mxu0
        %v2765 = vpop.f32.mrb[0].mxu0
        %v2766 = vpop.f32.mrb[0].mxu0
        %2767 = vdwg.mxu0
        %v2768 = vlaneseq
        %v2769 = vand.u32 %v2768, 127
        %vm2770 = vcmp.lt.s32.totalorder %v2769, 10
        %v2771 = vsel %vm2770, %v2763, -1e+30
        %vm2772 = vcmask 1040384
        %v2773 = vsel %vm2772, %v2771, -inf
        %2774 = vmax.xlane.f32.xlu0 %v2773
        %v2775 = vpop.xlane.xlu0 %2774
        %v2776 = vsub.f32 %v2771, %v2775
        %v2777 = vmul.f32 %v2776, 1.442695
        %v2778 = vpow.pop %v2777
        %v2779 = vsel %vm2772, %v2778, 0.0
        %2780 = vadd.xlane.f32.xlu0 %v2779
        %v2781 = vpop.xlane.xlu0 %2780
        %v2782 = vlog2.pop %v2781
        %v2783 = vmul.f32 %v2782, 0.6931472
        %v2784 = vsub.f32 %v2776, %v2783
        %2785 = vst [vmem:[%s437] sm:$0x1] %v2784
        %s2786 = sand.u32 %s272, 1
        %s2787 = scalar_lea.sflag [#allocation4], %s2786
        %s2788 = sand.u32 %s272, 1
        %s2789 = scalar_lea.vmem [#allocation10], %s2788
        // Predicated region
        $region81: #{lenet_forward.1} parent=63 // pred_check
          %p2790 = pneg %p282
        $region82: #{lenet_forward.1} parent=63 // pred_check_branch
          %2792 = sbr.rel (%p2790) target = $region84
        $region83: #{lenet_forward.1} parent=63 // pred_region
          %s2794 = ssub.s32 16, 16
          %2795 = vsyncadd %s2787, %s2794
          %s2796 = smul.addr %s28, 16
          %s2797 = scalar_lea.hbm %s11, %s2796
          %s2799 = sshll.u32 %s2789, 4
          %s2800 = int_to_ptr.vmem [resolvable:$true] %s2799
          %2802 = dma.vmem_to_hbm [thread:$0]  %s2800, 16, %s2797, %s2787
        $region84: #{lenet_forward.1} parent=63 // pred_fallthru
          _
      $region64: #{lenet_forward.1} parent=5 // pred_fallthru
        _
      %p2803 = scmp.le.s32.totalorder 2, %s23
      // Predicated region
      $region85: #{lenet_forward.1} parent=5 // pred_check
        %p2804 = pneg %p2803
      $region86: #{lenet_forward.1} parent=5 // pred_check_branch
        %2806 = sbr.rel (%p2804) target = $region88
      $region87: #{lenet_forward.1} parent=5 // pred_region
        %s2807 = ssub.s32 %s23, 2
        // Predicated region
        $region89: #{lenet_forward.1} parent=87 // pred_check
          %p2808 = pneg %p288
        $region90: #{lenet_forward.1} parent=87 // pred_check_branch
          %2810 = sbr.rel (%p2808) target = $region92
        $region91: #{lenet_forward.1} parent=87 // pred_region
          %s2811 = sand.u32 %s273, 1
          %s2812 = scalar_lea.sflag [#allocation4], %s2811
          %s2813 = sand.u32 %s273, 1
          %s2814 = scalar_lea.vmem [#allocation10], %s2813
          %2815 = dma.done %s2812, 16
        $region92: #{lenet_forward.1} parent=87 // pred_fallthru
          _
      $region88: #{lenet_forward.1} parent=5 // pred_fallthru
        _
    $region6: #{lenet_forward.1} parent=1 // loop_footer
      %s27 = sadd.s32 1, %s23
    $region7: #{lenet_forward.1} parent=1 // loop_footer_branch
      %22 = sbr.rel target = $region3
    $region8: #{lenet_forward.1} parent=1 // loop_exit
      _
    %2816 = vsyncpa [#allocation3], 1
    %s2817 = scalar_lea.sflag [#allocation3], 1
    %2818 = vsyncpa %s2817, 1
    %2819 = vsyncpa [#allocation6], 1
    %2820 = vsyncpa [#allocation9], 1
    %2821 = vsyncpa [#allocation4], 1
    %s2822 = scalar_lea.sflag [#allocation4], 1
    %2823 = vsyncpa %s2822, 1

</llo_original>
